<compile_context>
chip_gen: v7x
topology: tpu7x:2x2x1
jax: 0.10.0
libtpu: 0.0.40
codegen_flags: <defaults>
</compile_context>

<pallas_src>
import jax
import jax.numpy as jnp
from jax import lax
from jax.experimental import pallas as pl
from jax.experimental.pallas import tpu as pltpu


# ------------------------------- kernel ---------------------------------------


def _gelu(x):
    # exact GELU (PyTorch nn.GELU default)
    return 0.5 * x * (1.0 + lax.erf(x * 0.7071067811865476))


def _layernorm(x, g, b, eps=1e-5):
    mean = jnp.mean(x, axis=-1, keepdims=True)
    var = jnp.mean((x - mean) ** 2, axis=-1, keepdims=True)
    return (x - mean) * lax.rsqrt(var + eps) * g + b


def _dot(x, w_ref):
    # single-pass bf16 MXU matmul with f32 accumulation (weights pre-cast in prepare_params)
    return jnp.dot(x.astype(jnp.bfloat16), w_ref[...], preferred_element_type=jnp.float32)


def _mtcma_branch(x, vec_ref, w_att_ref, w1_ref, w2_ref, dim_v):
    """MTCMAModelV1 forward for a statically length-1 sequence.

    Softmax over a single key is exactly 1, so the attention block collapses to the
    value + output projections; those are folded together with fc_v into w_att_ref
    (one matmul) in prepare_params.  Only the value path affects the output.
    vec_ref rows: 0 norm_v_g, 1 norm_v_b, 2 b_att, 3 b1, 4 mlp_ln_g, 5 mlp_ln_b, 6 b2.
    """
    g = vec_ref[0:1, 0:dim_v]
    b = vec_ref[1:2, 0:dim_v]
    b_att = vec_ref[2:3, :]
    b1 = vec_ref[3:4, 0:128]
    ln_g = vec_ref[4:5, 0:128]
    ln_b = vec_ref[5:6, 0:128]
    b2 = vec_ref[6:7, :]

    xn = _layernorm(x, g, b)                       # norm_v
    att = _dot(xn, w_att_ref) + b_att              # folded fc_v @ Wv @ Wo : (bt, 256)
    h = _gelu(_dot(att, w1_ref) + b1)              # mlp: Linear(256,128) + GELU
    h = _layernorm(h, ln_g, ln_b)                  # mlp: LayerNorm(128)
    h = _gelu(_dot(h, w2_ref) + b2)                # mlp: Linear(128,256) + GELU
    return att + h                                 # residual


def _fused_forward_kernel(
    ds_ref, a_ref, v_ref,
    av_vec, av_watt, av_w1, av_w2,
    va_vec, va_watt, va_w1, va_w2,
    fc_w_mean, fc_w_std, head_vec, cl_w,
    o_ref,
):
    # downsampling_v: Linear(4,1) over the channel axis.  Video arrives flattened as
    # (bt, 512), so each channel is a lane-aligned 128-wide slice -> pure VPU weighted sum.
    v2 = v_ref[...]
    v_seq = (ds_ref[0] * v2[:, 0:128] + ds_ref[1] * v2[:, 128:256]
             + ds_ref[2] * v2[:, 256:384] + ds_ref[3] * v2[:, 384:512] + ds_ref[4])
    a_seq = a_ref[...]                             # (bt, 256)

    av = _mtcma_branch(v_seq, av_vec, av_watt, av_w1, av_w2, 128)   # values = video seq
    va = _mtcma_branch(a_seq, va_vec, va_watt, va_w1, va_w2, 256)   # values = audio seq

    # cat((av, va), dim=1) + StatPoolLayer(dim=1): mean || unbiased std over T=2.
    # fc_w is pre-split into mean/std halves so the (bt, 512) concat never materializes.
    mean = 0.5 * (av + va)
    d_av = av - mean
    d_va = va - mean
    std = jnp.sqrt(d_av * d_av + d_va * d_va)      # sum(dev^2)/(T-1), T=2

    h = _dot(mean, fc_w_mean) + _dot(std, fc_w_std) + head_vec[0:1, :]
    h = jnp.maximum(h, 0.0)                        # fc + ReLU (+ Dropout = identity, eval)
    o_ref[...] = _dot(h, cl_w) + head_vec[1:2, 0:128]   # cl_head, lane-padded to 128 wide


# ------------------------------ wrapper ----------------------------------------


def avmodel_forward(prep, a, v):
    """Fused LATE-branch AVModelV1 forward.  a: (B,256) f32, v: (B,4,128) f32 -> (B,3)."""
    B = a.shape[0]
    v = v.reshape(B, 512)                          # contiguous flatten: channel c -> lanes c*128..

    bt = min(512, ((B + 7) // 8) * 8)              # batch tile: mult of 8, up to 512 (fills MXU)
    n_blocks = pl.cdiv(B, bt)
    Bp = n_blocks * bt
    if Bp != B:                                    # pad so the grid tiles evenly
        a = jnp.pad(a, ((0, Bp - B), (0, 0)))
        v = jnp.pad(v, ((0, Bp - B), (0, 0)))

    weights = prep["weights"]
    in_specs = (
        [pl.BlockSpec(memory_space=pltpu.MemorySpace.SMEM),        # downsampling_v scalars
         pl.BlockSpec((bt, 256), lambda i: (i, 0)),                # audio
         pl.BlockSpec((bt, 512), lambda i: (i, 0))]                # video (flattened)
        + [pl.BlockSpec(w.shape, lambda i: (0, 0)) for w in weights]  # weights, VMEM-resident
    )

    out = pl.pallas_call(
        _fused_forward_kernel,
        out_shape=jax.ShapeDtypeStruct((Bp, 128), jnp.float32),    # lane-dense padded logits
        grid=(n_blocks,),
        in_specs=in_specs,
        out_specs=pl.BlockSpec((bt, 128), lambda i: (i, 0)),
        compiler_params=pltpu.CompilerParams(
            dimension_semantics=("parallel",),                     # shard batch tiles across TCs
            vmem_limit_bytes=32 * 1024 * 1024),
    )(prep["ds"], a, v, *weights)

    return out[:B, :3]                             # un-pad batch, strip lane padding


# ------------------------------- params ----------------------------------------


def prepare_params(params):
    """One-time repack: fold fc_v@Wv@Wo, cast matrices to bf16, pack vectors into slabs."""
    f32, bf16 = jnp.float32, jnp.bfloat16

    def pack_rows(rows, width=256):
        slab = jnp.zeros((8, width), f32)
        for i, r in enumerate(rows):
            r = jnp.asarray(r, f32).reshape(-1)
            slab = slab.at[i, : r.shape[0]].set(r)
        return slab

    def branch(p):
        at = p["attn"]
        w_vo = at["wv"] @ at["wo"]                                  # (256, 256) f32
        w_att = (p["fc_v_w"] @ w_vo).astype(bf16)                   # (dim_v, 256)
        b_att = p["fc_v_b"] @ w_vo + at["bv"] @ at["wo"] + at["bo"]
        vec = pack_rows([p["norm_v_g"], p["norm_v_b"], b_att,
                         p["mlp"]["b1"], p["mlp"]["ln_g"], p["mlp"]["ln_b"],
                         p["mlp"]["b2"]])
        return (vec, w_att, p["mlp"]["w1"].astype(bf16), p["mlp"]["w2"].astype(bf16))

    # downsampling_v Linear(4,1): 4 weights + bias packed into one SMEM scalar vector.
    ds = jnp.zeros((8,), f32)
    ds = ds.at[:4].set(params["ds_v_w"].reshape(-1)).at[4].set(params["ds_v_b"].reshape(-1)[0])

    fc_w = params["fc_w"].astype(f32)
    fc_w_mean = fc_w[:256].astype(bf16)            # multiplies the StatPool mean half
    fc_w_std = fc_w[256:].astype(bf16)             # multiplies the StatPool std half
    head_vec = pack_rows([params["fc_b"], params["cl_b"]])          # row0 fc_b, row1 cl_b
    cl_w = jnp.zeros((256, 128), f32).at[:, :3].set(params["cl_w"]).astype(bf16)

    weights = (branch(params["mtcma_av"]) + branch(params["mtcma_va"])
               + (fc_w_mean, fc_w_std, head_vec, cl_w))
    return {"ds": ds, "weights": weights}


def init_params(key):
    keys = iter(jax.random.split(key, 64))

    def w(shape, scale=0.02):
        return scale * jax.random.normal(next(keys), shape, dtype=jnp.float32)

    def zeros(s):
        return jnp.zeros(s, jnp.float32)

    def ones(s):
        return jnp.ones(s, jnp.float32)

    def mtcma(dq, dv):
        return {
            # query / key paths: kept for checkpoint-mapping fidelity; provably unused
            # for length-1 sequences (softmax over one key == 1), never sent to the kernel.
            "norm_q_g": ones((dq,)), "norm_q_b": zeros((dq,)),
            "norm_k_g": ones((dv,)), "norm_k_b": zeros((dv,)),
            "fc_q_w": w((dq, 256)), "fc_q_b": zeros((256,)),
            "fc_k_w": w((dv, 256)), "fc_k_b": zeros((256,)),
            # value path (used; weights stored (in_features, out_features))
            "norm_v_g": ones((dv,)), "norm_v_b": zeros((dv,)),
            "fc_v_w": w((dv, 256)), "fc_v_b": zeros((256,)),
            "attn": {
                "wq": w((256, 256)), "bq": zeros((256,)),
                "wk": w((256, 256)), "bk": zeros((256,)),
                "wv": w((256, 256)), "bv": zeros((256,)),
                "wo": w((256, 256)), "bo": zeros((256,)),
            },
            "mlp": {
                "w1": w((256, 128)), "b1": zeros((128,)),
                "ln_g": ones((128,)), "ln_b": zeros((128,)),
                "w2": w((128, 256)), "b2": zeros((256,)),
            },
        }

    return {
        "ds_v_w": w((4,)), "ds_v_b": zeros((1,)),
        "mtcma_av": mtcma(256, 128),   # dim_q=256, dim_v=128
        "mtcma_va": mtcma(128, 256),   # dim_q=128, dim_v=256
        "fc_w": w((512, 256)), "fc_b": zeros((256,)),
        "cl_w": w((256, 3)), "cl_b": zeros((3,)),
    }


if __name__ == "__main__":
    key = jax.random.PRNGKey(0)
    kp, ka, kv = jax.random.split(key, 3)
    params = init_params(kp)
    prep = prepare_params(params)                                # one-time repack / folds
    a = jax.random.normal(ka, (2, 256), dtype=jnp.float32)       # audio embedding (B, 256)
    v = jax.random.normal(kv, (2, 4, 128), dtype=jnp.float32)    # video features (B, C=4, D=128)
    out = jax.jit(avmodel_forward)(prep, a, v)
    out = jax.block_until_ready(out)
    assert out.shape == (2, 3) and out.dtype == jnp.float32
    print("KERNEL_OK")
</pallas_src>

<mosaic_0001>
module attributes {stable_mosaic.version = 11 : i64} {
  func.func @_fused_forward_kernel(%arg0: i32, %arg1: memref<8xf32, #tpu.memory_space<smem>>, %arg2: memref<8x256xf32, #tpu.memory_space<vmem>>, %arg3: memref<8x512xf32, #tpu.memory_space<vmem>>, %arg4: memref<8x256xf32, #tpu.memory_space<vmem>>, %arg5: memref<128x256xbf16, #tpu.memory_space<vmem>>, %arg6: memref<256x128xbf16, #tpu.memory_space<vmem>>, %arg7: memref<128x256xbf16, #tpu.memory_space<vmem>>, %arg8: memref<8x256xf32, #tpu.memory_space<vmem>>, %arg9: memref<256x256xbf16, #tpu.memory_space<vmem>>, %arg10: memref<256x128xbf16, #tpu.memory_space<vmem>>, %arg11: memref<128x256xbf16, #tpu.memory_space<vmem>>, %arg12: memref<256x256xbf16, #tpu.memory_space<vmem>>, %arg13: memref<256x256xbf16, #tpu.memory_space<vmem>>, %arg14: memref<8x256xf32, #tpu.memory_space<vmem>>, %arg15: memref<256x128xbf16, #tpu.memory_space<vmem>>, %arg16: memref<8x128xf32, #tpu.memory_space<vmem>>) attributes {dimension_semantics = [#tpu.dimension_semantics<parallel>], iteration_bounds = array<i64: 1>, scalar_prefetch = 0 : i64, scratch_operands = 0 : i64, tpu.core_type = #tpu.core_type<tc>, window_params = [{transform_indices = @transform_0, window_bounds = array<i64: 8>}, {transform_indices = @transform_1, window_bounds = array<i64: 8, 256>}, {transform_indices = @transform_2, window_bounds = array<i64: 8, 512>}, {pipeline_mode = #tpu.pipeline_mode<synchronous>, transform_indices = @transform_3, window_bounds = array<i64: 8, 256>}, {pipeline_mode = #tpu.pipeline_mode<synchronous>, transform_indices = @transform_4, window_bounds = array<i64: 128, 256>}, {pipeline_mode = #tpu.pipeline_mode<synchronous>, transform_indices = @transform_5, window_bounds = array<i64: 256, 128>}, {pipeline_mode = #tpu.pipeline_mode<synchronous>, transform_indices = @transform_6, window_bounds = array<i64: 128, 256>}, {pipeline_mode = #tpu.pipeline_mode<synchronous>, transform_indices = @transform_7, window_bounds = array<i64: 8, 256>}, {pipeline_mode = #tpu.pipeline_mode<synchronous>, transform_indices = @transform_8, window_bounds = array<i64: 256, 256>}, {pipeline_mode = #tpu.pipeline_mode<synchronous>, transform_indices = @transform_9, window_bounds = array<i64: 256, 128>}, {pipeline_mode = #tpu.pipeline_mode<synchronous>, transform_indices = @transform_10, window_bounds = array<i64: 128, 256>}, {pipeline_mode = #tpu.pipeline_mode<synchronous>, transform_indices = @transform_11, window_bounds = array<i64: 256, 256>}, {pipeline_mode = #tpu.pipeline_mode<synchronous>, transform_indices = @transform_12, window_bounds = array<i64: 256, 256>}, {pipeline_mode = #tpu.pipeline_mode<synchronous>, transform_indices = @transform_13, window_bounds = array<i64: 8, 256>}, {pipeline_mode = #tpu.pipeline_mode<synchronous>, transform_indices = @transform_14, window_bounds = array<i64: 256, 128>}, {transform_indices = @transform_15, window_bounds = array<i64: 8, 128>}]} {
    %c0 = arith.constant 0 : index
    %c0_0 = arith.constant 0 : index
    %0 = vector.load %arg3[%c0, %c0_0] : memref<8x512xf32, #tpu.memory_space<vmem>>, vector<8x512xf32>
    %c0_1 = arith.constant 0 : index
    %1 = memref.load %arg1[%c0_1] : memref<8xf32, #tpu.memory_space<smem>>
    %2 = vector.extract_strided_slice %0 {offsets = [0, 0], sizes = [8, 128], strides = [1, 1]} : vector<8x512xf32> to vector<8x128xf32>
    %3 = vector.broadcast %1 : f32 to vector<8x128xf32>
    %4 = arith.mulf %3, %2 : vector<8x128xf32>
    %c1 = arith.constant 1 : index
    %5 = memref.load %arg1[%c1] : memref<8xf32, #tpu.memory_space<smem>>
    %6 = vector.extract_strided_slice %0 {offsets = [0, 128], sizes = [8, 128], strides = [1, 1]} : vector<8x512xf32> to vector<8x128xf32>
    %7 = vector.broadcast %5 : f32 to vector<8x128xf32>
    %8 = arith.mulf %7, %6 : vector<8x128xf32>
    %9 = arith.addf %4, %8 : vector<8x128xf32>
    %c2 = arith.constant 2 : index
    %10 = memref.load %arg1[%c2] : memref<8xf32, #tpu.memory_space<smem>>
    %11 = vector.extract_strided_slice %0 {offsets = [0, 256], sizes = [8, 128], strides = [1, 1]} : vector<8x512xf32> to vector<8x128xf32>
    %12 = vector.broadcast %10 : f32 to vector<8x128xf32>
    %13 = arith.mulf %12, %11 : vector<8x128xf32>
    %14 = arith.addf %9, %13 : vector<8x128xf32>
    %c3 = arith.constant 3 : index
    %15 = memref.load %arg1[%c3] : memref<8xf32, #tpu.memory_space<smem>>
    %16 = vector.extract_strided_slice %0 {offsets = [0, 384], sizes = [8, 128], strides = [1, 1]} : vector<8x512xf32> to vector<8x128xf32>
    %17 = vector.broadcast %15 : f32 to vector<8x128xf32>
    %18 = arith.mulf %17, %16 : vector<8x128xf32>
    %19 = arith.addf %14, %18 : vector<8x128xf32>
    %c4 = arith.constant 4 : index
    %20 = memref.load %arg1[%c4] : memref<8xf32, #tpu.memory_space<smem>>
    %21 = vector.broadcast %20 : f32 to vector<8x128xf32>
    %22 = arith.addf %19, %21 : vector<8x128xf32>
    %c0_2 = arith.constant 0 : index
    %c0_3 = arith.constant 0 : index
    %23 = vector.load %arg2[%c0_2, %c0_3] : memref<8x256xf32, #tpu.memory_space<vmem>>, vector<8x256xf32>
    %c0_4 = arith.constant 0 : index
    %c0_5 = arith.constant 0 : index
    %24 = vector.load %arg4[%c0_4, %c0_5] : memref<8x256xf32, #tpu.memory_space<vmem>>, vector<1x128xf32>
    %c1_6 = arith.constant 1 : index
    %c0_7 = arith.constant 0 : index
    %25 = vector.load %arg4[%c1_6, %c0_7] : memref<8x256xf32, #tpu.memory_space<vmem>>, vector<1x128xf32>
    %c2_8 = arith.constant 2 : index
    %c0_9 = arith.constant 0 : index
    %26 = vector.load %arg4[%c2_8, %c0_9] : memref<8x256xf32, #tpu.memory_space<vmem>>, vector<1x256xf32>
    %c3_10 = arith.constant 3 : index
    %c0_11 = arith.constant 0 : index
    %27 = vector.load %arg4[%c3_10, %c0_11] : memref<8x256xf32, #tpu.memory_space<vmem>>, vector<1x128xf32>
    %c4_12 = arith.constant 4 : index
    %c0_13 = arith.constant 0 : index
    %28 = vector.load %arg4[%c4_12, %c0_13] : memref<8x256xf32, #tpu.memory_space<vmem>>, vector<1x128xf32>
    %c5 = arith.constant 5 : index
    %c0_14 = arith.constant 0 : index
    %29 = vector.load %arg4[%c5, %c0_14] : memref<8x256xf32, #tpu.memory_space<vmem>>, vector<1x128xf32>
    %c6 = arith.constant 6 : index
    %c0_15 = arith.constant 0 : index
    %30 = vector.load %arg4[%c6, %c0_15] : memref<8x256xf32, #tpu.memory_space<vmem>>, vector<1x256xf32>
    %cst = arith.constant dense<0.000000e+00> : vector<8xf32>
    %31 = vector.multi_reduction <add>, %22, %cst [1] : vector<8x128xf32> to vector<8xf32>
    %32 = vector.shape_cast %31 : vector<8xf32> to vector<8x1xf32>
    %cst_16 = arith.constant 1.280000e+02 : f32
    %33 = vector.broadcast %cst_16 : f32 to vector<8x1xf32>
    %34 = arith.divf %32, %33 : vector<8x1xf32>
    %35 = vector.broadcast %34 : vector<8x1xf32> to vector<8x128xf32>
    %36 = arith.subf %22, %35 : vector<8x128xf32>
    %37 = arith.mulf %36, %36 : vector<8x128xf32>
    %cst_17 = arith.constant dense<0.000000e+00> : vector<8xf32>
    %38 = vector.multi_reduction <add>, %37, %cst_17 [1] : vector<8x128xf32> to vector<8xf32>
    %39 = vector.shape_cast %38 : vector<8xf32> to vector<8x1xf32>
    %cst_18 = arith.constant 1.280000e+02 : f32
    %40 = vector.broadcast %cst_18 : f32 to vector<8x1xf32>
    %41 = arith.divf %39, %40 : vector<8x1xf32>
    %42 = vector.broadcast %34 : vector<8x1xf32> to vector<8x128xf32>
    %43 = arith.subf %22, %42 : vector<8x128xf32>
    %cst_19 = arith.constant 9.99999974E-6 : f32
    %44 = vector.broadcast %cst_19 : f32 to vector<8x1xf32>
    %45 = arith.addf %41, %44 : vector<8x1xf32>
    %46 = math.rsqrt %45 : vector<8x1xf32>
    %47 = vector.broadcast %46 : vector<8x1xf32> to vector<8x128xf32>
    %48 = arith.mulf %43, %47 : vector<8x128xf32>
    %49 = vector.broadcast %24 : vector<1x128xf32> to vector<8x128xf32>
    %50 = arith.mulf %48, %49 : vector<8x128xf32>
    %51 = vector.broadcast %25 : vector<1x128xf32> to vector<8x128xf32>
    %52 = arith.addf %50, %51 : vector<8x128xf32>
    %53 = arith.truncf %52 : vector<8x128xf32> to vector<8x128xbf16>
    %c0_20 = arith.constant 0 : index
    %c0_21 = arith.constant 0 : index
    %54 = vector.load %arg5[%c0_20, %c0_21] : memref<128x256xbf16, #tpu.memory_space<vmem>>, vector<128x256xbf16>
    %cst_22 = arith.constant dense<0.000000e+00> : vector<8x256xf32>
    %55 = tpu.matmul %53, %54, %cst_22 {dimension_numbers = #tpu.dot_dimension_numbers<[1], [0], [0], [1], [0, 0, 1, 1], [], []>} : vector<8x128xbf16>, vector<128x256xbf16>, vector<8x256xf32> -> vector<8x256xf32>
    %56 = vector.broadcast %26 : vector<1x256xf32> to vector<8x256xf32>
    %57 = arith.addf %55, %56 : vector<8x256xf32>
    %58 = arith.truncf %57 : vector<8x256xf32> to vector<8x256xbf16>
    %c0_23 = arith.constant 0 : index
    %c0_24 = arith.constant 0 : index
    %59 = vector.load %arg6[%c0_23, %c0_24] : memref<256x128xbf16, #tpu.memory_space<vmem>>, vector<256x128xbf16>
    %cst_25 = arith.constant dense<0.000000e+00> : vector<8x128xf32>
    %60 = tpu.matmul %58, %59, %cst_25 {dimension_numbers = #tpu.dot_dimension_numbers<[1], [0], [0], [1], [0, 0, 1, 1], [], []>} : vector<8x256xbf16>, vector<256x128xbf16>, vector<8x128xf32> -> vector<8x128xf32>
    %61 = vector.broadcast %27 : vector<1x128xf32> to vector<8x128xf32>
    %62 = arith.addf %60, %61 : vector<8x128xf32>
    %cst_26 = arith.constant 5.000000e-01 : f32
    %63 = vector.broadcast %cst_26 : f32 to vector<8x128xf32>
    %64 = arith.mulf %63, %62 : vector<8x128xf32>
    %cst_27 = arith.constant 0.707106769 : f32
    %65 = vector.broadcast %cst_27 : f32 to vector<8x128xf32>
    %66 = arith.mulf %62, %65 : vector<8x128xf32>
    %67 = math.erf %66 : vector<8x128xf32>
    %cst_28 = arith.constant 1.000000e+00 : f32
    %68 = vector.broadcast %cst_28 : f32 to vector<8x128xf32>
    %69 = arith.addf %68, %67 : vector<8x128xf32>
    %70 = arith.mulf %64, %69 : vector<8x128xf32>
    %cst_29 = arith.constant dense<0.000000e+00> : vector<8xf32>
    %71 = vector.multi_reduction <add>, %70, %cst_29 [1] : vector<8x128xf32> to vector<8xf32>
    %72 = vector.shape_cast %71 : vector<8xf32> to vector<8x1xf32>
    %cst_30 = arith.constant 1.280000e+02 : f32
    %73 = vector.broadcast %cst_30 : f32 to vector<8x1xf32>
    %74 = arith.divf %72, %73 : vector<8x1xf32>
    %75 = vector.broadcast %74 : vector<8x1xf32> to vector<8x128xf32>
    %76 = arith.subf %70, %75 : vector<8x128xf32>
    %77 = arith.mulf %76, %76 : vector<8x128xf32>
    %cst_31 = arith.constant dense<0.000000e+00> : vector<8xf32>
    %78 = vector.multi_reduction <add>, %77, %cst_31 [1] : vector<8x128xf32> to vector<8xf32>
    %79 = vector.shape_cast %78 : vector<8xf32> to vector<8x1xf32>
    %cst_32 = arith.constant 1.280000e+02 : f32
    %80 = vector.broadcast %cst_32 : f32 to vector<8x1xf32>
    %81 = arith.divf %79, %80 : vector<8x1xf32>
    %82 = vector.broadcast %74 : vector<8x1xf32> to vector<8x128xf32>
    %83 = arith.subf %70, %82 : vector<8x128xf32>
    %cst_33 = arith.constant 9.99999974E-6 : f32
    %84 = vector.broadcast %cst_33 : f32 to vector<8x1xf32>
    %85 = arith.addf %81, %84 : vector<8x1xf32>
    %86 = math.rsqrt %85 : vector<8x1xf32>
    %87 = vector.broadcast %86 : vector<8x1xf32> to vector<8x128xf32>
    %88 = arith.mulf %83, %87 : vector<8x128xf32>
    %89 = vector.broadcast %28 : vector<1x128xf32> to vector<8x128xf32>
    %90 = arith.mulf %88, %89 : vector<8x128xf32>
    %91 = vector.broadcast %29 : vector<1x128xf32> to vector<8x128xf32>
    %92 = arith.addf %90, %91 : vector<8x128xf32>
    %93 = arith.truncf %92 : vector<8x128xf32> to vector<8x128xbf16>
    %c0_34 = arith.constant 0 : index
    %c0_35 = arith.constant 0 : index
    %94 = vector.load %arg7[%c0_34, %c0_35] : memref<128x256xbf16, #tpu.memory_space<vmem>>, vector<128x256xbf16>
    %cst_36 = arith.constant dense<0.000000e+00> : vector<8x256xf32>
    %95 = tpu.matmul %93, %94, %cst_36 {dimension_numbers = #tpu.dot_dimension_numbers<[1], [0], [0], [1], [0, 0, 1, 1], [], []>} : vector<8x128xbf16>, vector<128x256xbf16>, vector<8x256xf32> -> vector<8x256xf32>
    %96 = vector.broadcast %30 : vector<1x256xf32> to vector<8x256xf32>
    %97 = arith.addf %95, %96 : vector<8x256xf32>
    %cst_37 = arith.constant 5.000000e-01 : f32
    %98 = vector.broadcast %cst_37 : f32 to vector<8x256xf32>
    %99 = arith.mulf %98, %97 : vector<8x256xf32>
    %cst_38 = arith.constant 0.707106769 : f32
    %100 = vector.broadcast %cst_38 : f32 to vector<8x256xf32>
    %101 = arith.mulf %97, %100 : vector<8x256xf32>
    %102 = math.erf %101 : vector<8x256xf32>
    %cst_39 = arith.constant 1.000000e+00 : f32
    %103 = vector.broadcast %cst_39 : f32 to vector<8x256xf32>
    %104 = arith.addf %103, %102 : vector<8x256xf32>
    %105 = arith.mulf %99, %104 : vector<8x256xf32>
    %106 = arith.addf %57, %105 : vector<8x256xf32>
    %c0_40 = arith.constant 0 : index
    %c0_41 = arith.constant 0 : index
    %107 = vector.load %arg8[%c0_40, %c0_41] : memref<8x256xf32, #tpu.memory_space<vmem>>, vector<1x256xf32>
    %c1_42 = arith.constant 1 : index
    %c0_43 = arith.constant 0 : index
    %108 = vector.load %arg8[%c1_42, %c0_43] : memref<8x256xf32, #tpu.memory_space<vmem>>, vector<1x256xf32>
    %c2_44 = arith.constant 2 : index
    %c0_45 = arith.constant 0 : index
    %109 = vector.load %arg8[%c2_44, %c0_45] : memref<8x256xf32, #tpu.memory_space<vmem>>, vector<1x256xf32>
    %c3_46 = arith.constant 3 : index
    %c0_47 = arith.constant 0 : index
    %110 = vector.load %arg8[%c3_46, %c0_47] : memref<8x256xf32, #tpu.memory_space<vmem>>, vector<1x128xf32>
    %c4_48 = arith.constant 4 : index
    %c0_49 = arith.constant 0 : index
    %111 = vector.load %arg8[%c4_48, %c0_49] : memref<8x256xf32, #tpu.memory_space<vmem>>, vector<1x128xf32>
    %c5_50 = arith.constant 5 : index
    %c0_51 = arith.constant 0 : index
    %112 = vector.load %arg8[%c5_50, %c0_51] : memref<8x256xf32, #tpu.memory_space<vmem>>, vector<1x128xf32>
    %c6_52 = arith.constant 6 : index
    %c0_53 = arith.constant 0 : index
    %113 = vector.load %arg8[%c6_52, %c0_53] : memref<8x256xf32, #tpu.memory_space<vmem>>, vector<1x256xf32>
    %cst_54 = arith.constant dense<0.000000e+00> : vector<8xf32>
    %114 = vector.multi_reduction <add>, %23, %cst_54 [1] : vector<8x256xf32> to vector<8xf32>
    %115 = vector.shape_cast %114 : vector<8xf32> to vector<8x1xf32>
    %cst_55 = arith.constant 2.560000e+02 : f32
    %116 = vector.broadcast %cst_55 : f32 to vector<8x1xf32>
    %117 = arith.divf %115, %116 : vector<8x1xf32>
    %118 = vector.broadcast %117 : vector<8x1xf32> to vector<8x256xf32>
    %119 = arith.subf %23, %118 : vector<8x256xf32>
    %120 = arith.mulf %119, %119 : vector<8x256xf32>
    %cst_56 = arith.constant dense<0.000000e+00> : vector<8xf32>
    %121 = vector.multi_reduction <add>, %120, %cst_56 [1] : vector<8x256xf32> to vector<8xf32>
    %122 = vector.shape_cast %121 : vector<8xf32> to vector<8x1xf32>
    %cst_57 = arith.constant 2.560000e+02 : f32
    %123 = vector.broadcast %cst_57 : f32 to vector<8x1xf32>
    %124 = arith.divf %122, %123 : vector<8x1xf32>
    %125 = vector.broadcast %117 : vector<8x1xf32> to vector<8x256xf32>
    %126 = arith.subf %23, %125 : vector<8x256xf32>
    %cst_58 = arith.constant 9.99999974E-6 : f32
    %127 = vector.broadcast %cst_58 : f32 to vector<8x1xf32>
    %128 = arith.addf %124, %127 : vector<8x1xf32>
    %129 = math.rsqrt %128 : vector<8x1xf32>
    %130 = vector.broadcast %129 : vector<8x1xf32> to vector<8x256xf32>
    %131 = arith.mulf %126, %130 : vector<8x256xf32>
    %132 = vector.broadcast %107 : vector<1x256xf32> to vector<8x256xf32>
    %133 = arith.mulf %131, %132 : vector<8x256xf32>
    %134 = vector.broadcast %108 : vector<1x256xf32> to vector<8x256xf32>
    %135 = arith.addf %133, %134 : vector<8x256xf32>
    %136 = arith.truncf %135 : vector<8x256xf32> to vector<8x256xbf16>
    %c0_59 = arith.constant 0 : index
    %c0_60 = arith.constant 0 : index
    %137 = vector.load %arg9[%c0_59, %c0_60] : memref<256x256xbf16, #tpu.memory_space<vmem>>, vector<256x256xbf16>
    %cst_61 = arith.constant dense<0.000000e+00> : vector<8x256xf32>
    %138 = tpu.matmul %136, %137, %cst_61 {dimension_numbers = #tpu.dot_dimension_numbers<[1], [0], [0], [1], [0, 0, 1, 1], [], []>} : vector<8x256xbf16>, vector<256x256xbf16>, vector<8x256xf32> -> vector<8x256xf32>
    %139 = vector.broadcast %109 : vector<1x256xf32> to vector<8x256xf32>
    %140 = arith.addf %138, %139 : vector<8x256xf32>
    %141 = arith.truncf %140 : vector<8x256xf32> to vector<8x256xbf16>
    %c0_62 = arith.constant 0 : index
    %c0_63 = arith.constant 0 : index
    %142 = vector.load %arg10[%c0_62, %c0_63] : memref<256x128xbf16, #tpu.memory_space<vmem>>, vector<256x128xbf16>
    %cst_64 = arith.constant dense<0.000000e+00> : vector<8x128xf32>
    %143 = tpu.matmul %141, %142, %cst_64 {dimension_numbers = #tpu.dot_dimension_numbers<[1], [0], [0], [1], [0, 0, 1, 1], [], []>} : vector<8x256xbf16>, vector<256x128xbf16>, vector<8x128xf32> -> vector<8x128xf32>
    %144 = vector.broadcast %110 : vector<1x128xf32> to vector<8x128xf32>
    %145 = arith.addf %143, %144 : vector<8x128xf32>
    %cst_65 = arith.constant 5.000000e-01 : f32
    %146 = vector.broadcast %cst_65 : f32 to vector<8x128xf32>
    %147 = arith.mulf %146, %145 : vector<8x128xf32>
    %cst_66 = arith.constant 0.707106769 : f32
    %148 = vector.broadcast %cst_66 : f32 to vector<8x128xf32>
    %149 = arith.mulf %145, %148 : vector<8x128xf32>
    %150 = math.erf %149 : vector<8x128xf32>
    %cst_67 = arith.constant 1.000000e+00 : f32
    %151 = vector.broadcast %cst_67 : f32 to vector<8x128xf32>
    %152 = arith.addf %151, %150 : vector<8x128xf32>
    %153 = arith.mulf %147, %152 : vector<8x128xf32>
    %cst_68 = arith.constant dense<0.000000e+00> : vector<8xf32>
    %154 = vector.multi_reduction <add>, %153, %cst_68 [1] : vector<8x128xf32> to vector<8xf32>
    %155 = vector.shape_cast %154 : vector<8xf32> to vector<8x1xf32>
    %cst_69 = arith.constant 1.280000e+02 : f32
    %156 = vector.broadcast %cst_69 : f32 to vector<8x1xf32>
    %157 = arith.divf %155, %156 : vector<8x1xf32>
    %158 = vector.broadcast %157 : vector<8x1xf32> to vector<8x128xf32>
    %159 = arith.subf %153, %158 : vector<8x128xf32>
    %160 = arith.mulf %159, %159 : vector<8x128xf32>
    %cst_70 = arith.constant dense<0.000000e+00> : vector<8xf32>
    %161 = vector.multi_reduction <add>, %160, %cst_70 [1] : vector<8x128xf32> to vector<8xf32>
    %162 = vector.shape_cast %161 : vector<8xf32> to vector<8x1xf32>
    %cst_71 = arith.constant 1.280000e+02 : f32
    %163 = vector.broadcast %cst_71 : f32 to vector<8x1xf32>
    %164 = arith.divf %162, %163 : vector<8x1xf32>
    %165 = vector.broadcast %157 : vector<8x1xf32> to vector<8x128xf32>
    %166 = arith.subf %153, %165 : vector<8x128xf32>
    %cst_72 = arith.constant 9.99999974E-6 : f32
    %167 = vector.broadcast %cst_72 : f32 to vector<8x1xf32>
    %168 = arith.addf %164, %167 : vector<8x1xf32>
    %169 = math.rsqrt %168 : vector<8x1xf32>
    %170 = vector.broadcast %169 : vector<8x1xf32> to vector<8x128xf32>
    %171 = arith.mulf %166, %170 : vector<8x128xf32>
    %172 = vector.broadcast %111 : vector<1x128xf32> to vector<8x128xf32>
    %173 = arith.mulf %171, %172 : vector<8x128xf32>
    %174 = vector.broadcast %112 : vector<1x128xf32> to vector<8x128xf32>
    %175 = arith.addf %173, %174 : vector<8x128xf32>
    %176 = arith.truncf %175 : vector<8x128xf32> to vector<8x128xbf16>
    %c0_73 = arith.constant 0 : index
    %c0_74 = arith.constant 0 : index
    %177 = vector.load %arg11[%c0_73, %c0_74] : memref<128x256xbf16, #tpu.memory_space<vmem>>, vector<128x256xbf16>
    %cst_75 = arith.constant dense<0.000000e+00> : vector<8x256xf32>
    %178 = tpu.matmul %176, %177, %cst_75 {dimension_numbers = #tpu.dot_dimension_numbers<[1], [0], [0], [1], [0, 0, 1, 1], [], []>} : vector<8x128xbf16>, vector<128x256xbf16>, vector<8x256xf32> -> vector<8x256xf32>
    %179 = vector.broadcast %113 : vector<1x256xf32> to vector<8x256xf32>
    %180 = arith.addf %178, %179 : vector<8x256xf32>
    %cst_76 = arith.constant 5.000000e-01 : f32
    %181 = vector.broadcast %cst_76 : f32 to vector<8x256xf32>
    %182 = arith.mulf %181, %180 : vector<8x256xf32>
    %cst_77 = arith.constant 0.707106769 : f32
    %183 = vector.broadcast %cst_77 : f32 to vector<8x256xf32>
    %184 = arith.mulf %180, %183 : vector<8x256xf32>
    %185 = math.erf %184 : vector<8x256xf32>
    %cst_78 = arith.constant 1.000000e+00 : f32
    %186 = vector.broadcast %cst_78 : f32 to vector<8x256xf32>
    %187 = arith.addf %186, %185 : vector<8x256xf32>
    %188 = arith.mulf %182, %187 : vector<8x256xf32>
    %189 = arith.addf %140, %188 : vector<8x256xf32>
    %190 = arith.addf %106, %189 : vector<8x256xf32>
    %cst_79 = arith.constant 5.000000e-01 : f32
    %191 = vector.broadcast %cst_79 : f32 to vector<8x256xf32>
    %192 = arith.mulf %191, %190 : vector<8x256xf32>
    %193 = arith.subf %106, %192 : vector<8x256xf32>
    %194 = arith.subf %189, %192 : vector<8x256xf32>
    %195 = arith.mulf %193, %193 : vector<8x256xf32>
    %196 = arith.mulf %194, %194 : vector<8x256xf32>
    %197 = arith.addf %195, %196 : vector<8x256xf32>
    %198 = math.sqrt %197 : vector<8x256xf32>
    %199 = arith.truncf %192 : vector<8x256xf32> to vector<8x256xbf16>
    %c0_80 = arith.constant 0 : index
    %c0_81 = arith.constant 0 : index
    %200 = vector.load %arg12[%c0_80, %c0_81] : memref<256x256xbf16, #tpu.memory_space<vmem>>, vector<256x256xbf16>
    %cst_82 = arith.constant dense<0.000000e+00> : vector<8x256xf32>
    %201 = tpu.matmul %199, %200, %cst_82 {dimension_numbers = #tpu.dot_dimension_numbers<[1], [0], [0], [1], [0, 0, 1, 1], [], []>} : vector<8x256xbf16>, vector<256x256xbf16>, vector<8x256xf32> -> vector<8x256xf32>
    %202 = arith.truncf %198 : vector<8x256xf32> to vector<8x256xbf16>
    %c0_83 = arith.constant 0 : index
    %c0_84 = arith.constant 0 : index
    %203 = vector.load %arg13[%c0_83, %c0_84] : memref<256x256xbf16, #tpu.memory_space<vmem>>, vector<256x256xbf16>
    %cst_85 = arith.constant dense<0.000000e+00> : vector<8x256xf32>
    %204 = tpu.matmul %202, %203, %cst_85 {dimension_numbers = #tpu.dot_dimension_numbers<[1], [0], [0], [1], [0, 0, 1, 1], [], []>} : vector<8x256xbf16>, vector<256x256xbf16>, vector<8x256xf32> -> vector<8x256xf32>
    %205 = arith.addf %201, %204 : vector<8x256xf32>
    %c0_86 = arith.constant 0 : index
    %c0_87 = arith.constant 0 : index
    %206 = vector.load %arg14[%c0_86, %c0_87] : memref<8x256xf32, #tpu.memory_space<vmem>>, vector<1x256xf32>
    %207 = vector.broadcast %206 : vector<1x256xf32> to vector<8x256xf32>
    %208 = arith.addf %205, %207 : vector<8x256xf32>
    %cst_88 = arith.constant 0.000000e+00 : f32
    %209 = vector.broadcast %cst_88 : f32 to vector<8x256xf32>
    %210 = arith.maximumf %208, %209 : vector<8x256xf32>
    %211 = arith.truncf %210 : vector<8x256xf32> to vector<8x256xbf16>
    %c0_89 = arith.constant 0 : index
    %c0_90 = arith.constant 0 : index
    %212 = vector.load %arg15[%c0_89, %c0_90] : memref<256x128xbf16, #tpu.memory_space<vmem>>, vector<256x128xbf16>
    %cst_91 = arith.constant dense<0.000000e+00> : vector<8x128xf32>
    %213 = tpu.matmul %211, %212, %cst_91 {dimension_numbers = #tpu.dot_dimension_numbers<[1], [0], [0], [1], [0, 0, 1, 1], [], []>} : vector<8x256xbf16>, vector<256x128xbf16>, vector<8x128xf32> -> vector<8x128xf32>
    %c1_92 = arith.constant 1 : index
    %c0_93 = arith.constant 0 : index
    %214 = vector.load %arg14[%c1_92, %c0_93] : memref<8x256xf32, #tpu.memory_space<vmem>>, vector<1x128xf32>
    %215 = vector.broadcast %214 : vector<1x128xf32> to vector<8x128xf32>
    %216 = arith.addf %213, %215 : vector<8x128xf32>
    %c0_94 = arith.constant 0 : index
    %c0_95 = arith.constant 0 : index
    %217 = vector.load %arg16[%c0_94, %c0_95] : memref<8x128xf32, #tpu.memory_space<vmem>>, vector<8x128xf32>
    tpu.vector_store %arg16[%c0_94, %c0_95], %216 {strides = array<i32>} : memref<8x128xf32, #tpu.memory_space<vmem>>, vector<8x128xf32>,
    return
  }
  func.func @transform_0(%arg0: i32) -> i32 {
    %c0_i32 = arith.constant 0 : i32
    %c0_i32_0 = arith.constant 0 : i32
    return %c0_i32 : i32
  }
  func.func @transform_1(%arg0: i32) -> (i32, i32) {
    %c0_i32 = arith.constant 0 : i32
    %c0_i32_0 = arith.constant 0 : i32
    return %arg0, %c0_i32 : i32, i32
  }
  func.func @transform_2(%arg0: i32) -> (i32, i32) {
    %c0_i32 = arith.constant 0 : i32
    %c0_i32_0 = arith.constant 0 : i32
    return %arg0, %c0_i32 : i32, i32
  }
  func.func @transform_3(%arg0: i32) -> (i32, i32) {
    %c0_i32 = arith.constant 0 : i32
    %c0_i32_0 = arith.constant 0 : i32
    %c0_i32_1 = arith.constant 0 : i32
    return %c0_i32, %c0_i32_0 : i32, i32
  }
  func.func @transform_4(%arg0: i32) -> (i32, i32) {
    %c0_i32 = arith.constant 0 : i32
    %c0_i32_0 = arith.constant 0 : i32
    %c0_i32_1 = arith.constant 0 : i32
    return %c0_i32, %c0_i32_0 : i32, i32
  }
  func.func @transform_5(%arg0: i32) -> (i32, i32) {
    %c0_i32 = arith.constant 0 : i32
    %c0_i32_0 = arith.constant 0 : i32
    %c0_i32_1 = arith.constant 0 : i32
    return %c0_i32, %c0_i32_0 : i32, i32
  }
  func.func @transform_6(%arg0: i32) -> (i32, i32) {
    %c0_i32 = arith.constant 0 : i32
    %c0_i32_0 = arith.constant 0 : i32
    %c0_i32_1 = arith.constant 0 : i32
    return %c0_i32, %c0_i32_0 : i32, i32
  }
  func.func @transform_7(%arg0: i32) -> (i32, i32) {
    %c0_i32 = arith.constant 0 : i32
    %c0_i32_0 = arith.constant 0 : i32
    %c0_i32_1 = arith.constant 0 : i32
    return %c0_i32, %c0_i32_0 : i32, i32
  }
  func.func @transform_8(%arg0: i32) -> (i32, i32) {
    %c0_i32 = arith.constant 0 : i32
    %c0_i32_0 = arith.constant 0 : i32
    %c0_i32_1 = arith.constant 0 : i32
    return %c0_i32, %c0_i32_0 : i32, i32
  }
  func.func @transform_9(%arg0: i32) -> (i32, i32) {
    %c0_i32 = arith.constant 0 : i32
    %c0_i32_0 = arith.constant 0 : i32
    %c0_i32_1 = arith.constant 0 : i32
    return %c0_i32, %c0_i32_0 : i32, i32
  }
  func.func @transform_10(%arg0: i32) -> (i32, i32) {
    %c0_i32 = arith.constant 0 : i32
    %c0_i32_0 = arith.constant 0 : i32
    %c0_i32_1 = arith.constant 0 : i32
    return %c0_i32, %c0_i32_0 : i32, i32
  }
  func.func @transform_11(%arg0: i32) -> (i32, i32) {
    %c0_i32 = arith.constant 0 : i32
    %c0_i32_0 = arith.constant 0 : i32
    %c0_i32_1 = arith.constant 0 : i32
    return %c0_i32, %c0_i32_0 : i32, i32
  }
  func.func @transform_12(%arg0: i32) -> (i32, i32) {
    %c0_i32 = arith.constant 0 : i32
    %c0_i32_0 = arith.constant 0 : i32
    %c0_i32_1 = arith.constant 0 : i32
    return %c0_i32, %c0_i32_0 : i32, i32
  }
  func.func @transform_13(%arg0: i32) -> (i32, i32) {
    %c0_i32 = arith.constant 0 : i32
    %c0_i32_0 = arith.constant 0 : i32
    %c0_i32_1 = arith.constant 0 : i32
    return %c0_i32, %c0_i32_0 : i32, i32
  }
  func.func @transform_14(%arg0: i32) -> (i32, i32) {
    %c0_i32 = arith.constant 0 : i32
    %c0_i32_0 = arith.constant 0 : i32
    %c0_i32_1 = arith.constant 0 : i32
    return %c0_i32, %c0_i32_0 : i32, i32
  }
  func.func @transform_15(%arg0: i32) -> (i32, i32) {
    %c0_i32 = arith.constant 0 : i32
    %c0_i32_0 = arith.constant 0 : i32
    return %arg0, %c0_i32 : i32, i32
  }
}

</mosaic_0001>

<llo_original>
// kernel: avmodel_forward.1
$region0: #{avmodel_forward.1}
  #allocation0 [shape = 'u32[]', space=smem, size = 0x4, offset = 0x4, fixed_abs, tag = 'smem constant byte address 0x4 - core index']
  #allocation1 [shape = 'u32[144,128]{1,0:T(1,128)}', space=vmem, size = 0x12000, scoped, tag = 'internal scratch']
  %s0 = inlined_call_operand.vmem [shape: f32[8], index: 0, kind: input, shape index: {}]
  %s1 = inlined_call_operand.vmem [shape: f32[8,256], index: 1, kind: input, shape index: {}]
  %s2 = inlined_call_operand.vmem [shape: f32[8,512], index: 2, kind: input, shape index: {}]
  %s3 = inlined_call_operand.vmem [shape: f32[8,256], index: 3, kind: input, shape index: {}]
  %s4 = inlined_call_operand.hbm [shape: bf16[128,256], index: 4, kind: input, shape index: {}]
  %s5 = inlined_call_operand.hbm [shape: bf16[256,128], index: 5, kind: input, shape index: {}]
  %s6 = inlined_call_operand.hbm [shape: bf16[128,256], index: 6, kind: input, shape index: {}]
  %s7 = inlined_call_operand.vmem [shape: f32[8,256], index: 7, kind: input, shape index: {}]
  %s8 = inlined_call_operand.hbm [shape: bf16[256,256], index: 8, kind: input, shape index: {}]
  %s9 = inlined_call_operand.hbm [shape: bf16[256,128], index: 9, kind: input, shape index: {}]
  %s10 = inlined_call_operand.hbm [shape: bf16[128,256], index: 10, kind: input, shape index: {}]
  %s11 = inlined_call_operand.hbm [shape: bf16[256,256], index: 11, kind: input, shape index: {}]
  %s12 = inlined_call_operand.hbm [shape: bf16[256,256], index: 12, kind: input, shape index: {}]
  %s13 = inlined_call_operand.vmem [shape: f32[8,256], index: 13, kind: input, shape index: {}]
  %s14 = inlined_call_operand.hbm [shape: bf16[256,128], index: 14, kind: input, shape index: {}]
  %s15 = inlined_call_operand.vmem [shape: f32[8,128], index: 15, kind: output, shape index: {}]
  %s16 = sld [smem:[#allocation0]]
  $region110: #{avmodel_forward.1} parent=0
    _
  %s18 = ssub.s32 1, %s16
  %s19 = scalar_select 0, %s18, %s16
  $region1: #{avmodel_forward.1} parent=0
    #allocation2 [shape = 'u8[512]{0}', space=smem, size = 0x200, scoped, tag = 'input window, operand 0, single buffered']
    #allocation3 [shape = 's32[1]{0}', space=sflag, size = 0x4, scoped, tag = 'scoped memory for avmodel_forward.1']
    #allocation4 [shape = 's32[1]{0}', space=sflag, size = 0x4, scoped, tag = 'scoped memory for avmodel_forward.1']
    #allocation5 [shape = 'u8[65536]{0}', space=vmem, size = 0x10000, scoped, tag = 'input window, operand 4, single buffered']
    #allocation6 [shape = 'u8[65536]{0}', space=vmem, size = 0x10000, scoped, tag = 'input window, operand 5, single buffered']
    #allocation7 [shape = 's32[1]{0}', space=sflag, size = 0x4, scoped, tag = 'scoped memory for avmodel_forward.1']
    #allocation8 [shape = 'u8[65536]{0}', space=vmem, size = 0x10000, scoped, tag = 'input window, operand 6, single buffered']
    #allocation9 [shape = 'u8[131072]{0}', space=vmem, size = 0x20000, scoped, tag = 'input window, operand 8, single buffered']
    #allocation10 [shape = 's32[1]{0}', space=sflag, size = 0x4, scoped, tag = 'scoped memory for avmodel_forward.1']
    #allocation11 [shape = 'u8[65536]{0}', space=vmem, size = 0x10000, scoped, tag = 'input window, operand 9, single buffered']
    #allocation12 [shape = 'u8[65536]{0}', space=vmem, size = 0x10000, scoped, tag = 'input window, operand 10, single buffered']
    #allocation13 [shape = 's32[1]{0}', space=sflag, size = 0x4, scoped, tag = 'scoped memory for avmodel_forward.1']
    #allocation14 [shape = 'u8[131072]{0}', space=vmem, size = 0x20000, scoped, tag = 'input window, operand 11, single buffered']
    #allocation15 [shape = 'u8[131072]{0}', space=vmem, size = 0x20000, scoped, tag = 'input window, operand 12, single buffered']
    #allocation16 [shape = 's32[1]{0}', space=sflag, size = 0x4, scoped, tag = 'scoped memory for avmodel_forward.1']
    #allocation17 [shape = 'u8[65536]{0}', space=vmem, size = 0x10000, scoped, tag = 'input window, operand 14, single buffered']
    %20 = vsyncpa [#allocation4], 0
    %21 = vsyncpa [#allocation3], 0
    %22 = vsyncpa [#allocation7], 0
    %23 = vsyncpa [#allocation10], 0
    %24 = vsyncpa [#allocation13], 0
    %25 = vsyncpa [#allocation16], 0
    // Predicated region
    $region2: #{avmodel_forward.1} parent=1 // pred_check
      _
    $region3: #{avmodel_forward.1} parent=1 // pred_check_branch
      %27 = sbr.rel (0) target = $region5
    $region4: #{avmodel_forward.1} parent=1 // pred_region
      %s29 = ssub.s32 16, 16
      %30 = vsyncadd [#allocation4], %s29
      %s32 = sshll.u32 %s0, 4
      %s33 = int_to_ptr.vmem [resolvable:$true] %s32
      %35 = dma.vmem_to_smem %s33, 16, [#allocation2], [#allocation4]
    $region5: #{avmodel_forward.1} parent=1 // pred_fallthru
      _
    // Predicated region
    $region6: #{avmodel_forward.1} parent=1 // pred_check
      _
    $region7: #{avmodel_forward.1} parent=1 // pred_check_branch
      %37 = sbr.rel (0) target = $region9
    $region8: #{avmodel_forward.1} parent=1 // pred_region
      _
    $region9: #{avmodel_forward.1} parent=1 // pred_fallthru
      _
    // Predicated region
    $region10: #{avmodel_forward.1} parent=1 // pred_check
      _
    $region11: #{avmodel_forward.1} parent=1 // pred_check_branch
      %39 = sbr.rel (0) target = $region13
    $region12: #{avmodel_forward.1} parent=1 // pred_region
      _
    $region13: #{avmodel_forward.1} parent=1 // pred_fallthru
      _
    // Predicated region
    $region14: #{avmodel_forward.1} parent=1 // pred_check
      _
    $region15: #{avmodel_forward.1} parent=1 // pred_check_branch
      %41 = sbr.rel (0) target = $region17
    $region16: #{avmodel_forward.1} parent=1 // pred_region
      _
    $region17: #{avmodel_forward.1} parent=1 // pred_fallthru
      _
    // Predicated region
    $region18: #{avmodel_forward.1} parent=1 // pred_check
      _
    $region19: #{avmodel_forward.1} parent=1 // pred_check_branch
      %43 = sbr.rel (0) target = $region21
    $region20: #{avmodel_forward.1} parent=1 // pred_region
      %s45 = ssub.s32 2048, 2048
      %46 = vsyncadd [#allocation3], %s45
      %s47 = sshll.u32 [#allocation5], 4
      %s48 = int_to_ptr.vmem [resolvable:$true] %s47
      %53 = dma.hbm_to_vmem [thread:$0]  %s4, 2048, %s48, [#allocation3], 128, 128, 8
    $region21: #{avmodel_forward.1} parent=1 // pred_fallthru
      _
    // Predicated region
    $region22: #{avmodel_forward.1} parent=1 // pred_check
      _
    $region23: #{avmodel_forward.1} parent=1 // pred_check_branch
      %55 = sbr.rel (0) target = $region25
    $region24: #{avmodel_forward.1} parent=1 // pred_region
      %s57 = ssub.s32 2048, 2048
      %58 = vsyncadd [#allocation7], %s57
      %s59 = sshll.u32 [#allocation6], 4
      %s60 = int_to_ptr.vmem [resolvable:$true] %s59
      %65 = dma.hbm_to_vmem [thread:$0]  %s5, 2048, %s60, [#allocation7], 64, 64, 4
    $region25: #{avmodel_forward.1} parent=1 // pred_fallthru
      _
    // Predicated region
    $region26: #{avmodel_forward.1} parent=1 // pred_check
      _
    $region27: #{avmodel_forward.1} parent=1 // pred_check_branch
      %67 = sbr.rel (0) target = $region29
    $region28: #{avmodel_forward.1} parent=1 // pred_region
      %s69 = ssub.s32 2048, 2048
      %70 = vsyncadd [#allocation7], %s69
      %s71 = sshll.u32 [#allocation8], 4
      %s72 = int_to_ptr.vmem [resolvable:$true] %s71
      %77 = dma.hbm_to_vmem [thread:$0]  %s6, 2048, %s72, [#allocation7], 128, 128, 8
    $region29: #{avmodel_forward.1} parent=1 // pred_fallthru
      _
    // Predicated region
    $region30: #{avmodel_forward.1} parent=1 // pred_check
      _
    $region31: #{avmodel_forward.1} parent=1 // pred_check_branch
      %79 = sbr.rel (0) target = $region33
    $region32: #{avmodel_forward.1} parent=1 // pred_region
      _
    $region33: #{avmodel_forward.1} parent=1 // pred_fallthru
      _
    // Predicated region
    $region34: #{avmodel_forward.1} parent=1 // pred_check
      _
    $region35: #{avmodel_forward.1} parent=1 // pred_check_branch
      %81 = sbr.rel (0) target = $region37
    $region36: #{avmodel_forward.1} parent=1 // pred_region
      %s83 = ssub.s32 4096, 4096
      %84 = vsyncadd [#allocation10], %s83
      %s85 = sshll.u32 [#allocation9], 4
      %s86 = int_to_ptr.vmem [resolvable:$true] %s85
      %91 = dma.hbm_to_vmem [thread:$0]  %s8, 4096, %s86, [#allocation10], 128, 128, 8
    $region37: #{avmodel_forward.1} parent=1 // pred_fallthru
      _
    // Predicated region
    $region38: #{avmodel_forward.1} parent=1 // pred_check
      _
    $region39: #{avmodel_forward.1} parent=1 // pred_check_branch
      %93 = sbr.rel (0) target = $region41
    $region40: #{avmodel_forward.1} parent=1 // pred_region
      %s95 = ssub.s32 2048, 2048
      %96 = vsyncadd [#allocation10], %s95
      %s97 = sshll.u32 [#allocation11], 4
      %s98 = int_to_ptr.vmem [resolvable:$true] %s97
      %103 = dma.hbm_to_vmem [thread:$0]  %s9, 2048, %s98, [#allocation10], 64, 64, 4
    $region41: #{avmodel_forward.1} parent=1 // pred_fallthru
      _
    // Predicated region
    $region42: #{avmodel_forward.1} parent=1 // pred_check
      _
    $region43: #{avmodel_forward.1} parent=1 // pred_check_branch
      %105 = sbr.rel (0) target = $region45
    $region44: #{avmodel_forward.1} parent=1 // pred_region
      %s107 = ssub.s32 2048, 2048
      %108 = vsyncadd [#allocation13], %s107
      %s109 = sshll.u32 [#allocation12], 4
      %s110 = int_to_ptr.vmem [resolvable:$true] %s109
      %115 = dma.hbm_to_vmem [thread:$0]  %s10, 2048, %s110, [#allocation13], 128, 128, 8
    $region45: #{avmodel_forward.1} parent=1 // pred_fallthru
      _
    // Predicated region
    $region46: #{avmodel_forward.1} parent=1 // pred_check
      _
    $region47: #{avmodel_forward.1} parent=1 // pred_check_branch
      %117 = sbr.rel (0) target = $region49
    $region48: #{avmodel_forward.1} parent=1 // pred_region
      %s119 = ssub.s32 4096, 4096
      %120 = vsyncadd [#allocation13], %s119
      %s121 = sshll.u32 [#allocation14], 4
      %s122 = int_to_ptr.vmem [resolvable:$true] %s121
      %127 = dma.hbm_to_vmem [thread:$0]  %s11, 4096, %s122, [#allocation13], 128, 128, 8
    $region49: #{avmodel_forward.1} parent=1 // pred_fallthru
      _
    // Predicated region
    $region50: #{avmodel_forward.1} parent=1 // pred_check
      _
    $region51: #{avmodel_forward.1} parent=1 // pred_check_branch
      %129 = sbr.rel (0) target = $region53
    $region52: #{avmodel_forward.1} parent=1 // pred_region
      %s131 = ssub.s32 4096, 4096
      %132 = vsyncadd [#allocation16], %s131
      %s133 = sshll.u32 [#allocation15], 4
      %s134 = int_to_ptr.vmem [resolvable:$true] %s133
      %139 = dma.hbm_to_vmem [thread:$0]  %s12, 4096, %s134, [#allocation16], 128, 128, 8
    $region53: #{avmodel_forward.1} parent=1 // pred_fallthru
      _
    // Predicated region
    $region54: #{avmodel_forward.1} parent=1 // pred_check
      _
    $region55: #{avmodel_forward.1} parent=1 // pred_check_branch
      %141 = sbr.rel (0) target = $region57
    $region56: #{avmodel_forward.1} parent=1 // pred_region
      _
    $region57: #{avmodel_forward.1} parent=1 // pred_fallthru
      _
    // Predicated region
    $region58: #{avmodel_forward.1} parent=1 // pred_check
      _
    $region59: #{avmodel_forward.1} parent=1 // pred_check_branch
      %143 = sbr.rel (0) target = $region61
    $region60: #{avmodel_forward.1} parent=1 // pred_region
      %s145 = ssub.s32 2048, 2048
      %146 = vsyncadd [#allocation16], %s145
      %s147 = sshll.u32 [#allocation17], 4
      %s148 = int_to_ptr.vmem [resolvable:$true] %s147
      %153 = dma.hbm_to_vmem [thread:$0]  %s14, 2048, %s148, [#allocation16], 64, 64, 4
    $region61: #{avmodel_forward.1} parent=1 // pred_fallthru
      _
    // Predicated region
    $region62: #{avmodel_forward.1} parent=1 // pred_check
      _
    $region63: #{avmodel_forward.1} parent=1 // pred_check_branch
      %155 = sbr.rel (0) target = $region65
    $region64: #{avmodel_forward.1} parent=1 // pred_region
      %156 = dma.done [#allocation4], 16
    $region65: #{avmodel_forward.1} parent=1 // pred_fallthru
      _
    // Predicated region
    $region66: #{avmodel_forward.1} parent=1 // pred_check
      _
    $region67: #{avmodel_forward.1} parent=1 // pred_check_branch
      %158 = sbr.rel (0) target = $region69
    $region68: #{avmodel_forward.1} parent=1 // pred_region
      %159 = dma.done [#allocation3], 2048
    $region69: #{avmodel_forward.1} parent=1 // pred_fallthru
      _
    // Predicated region
    $region70: #{avmodel_forward.1} parent=1 // pred_check
      _
    $region71: #{avmodel_forward.1} parent=1 // pred_check_branch
      %161 = sbr.rel (0) target = $region73
    $region72: #{avmodel_forward.1} parent=1 // pred_region
      %162 = dma.done [#allocation7], 2048
    $region73: #{avmodel_forward.1} parent=1 // pred_fallthru
      _
    // Predicated region
    $region74: #{avmodel_forward.1} parent=1 // pred_check
      _
    $region75: #{avmodel_forward.1} parent=1 // pred_check_branch
      %164 = sbr.rel (0) target = $region77
    $region76: #{avmodel_forward.1} parent=1 // pred_region
      %165 = dma.done [#allocation7], 2048
    $region77: #{avmodel_forward.1} parent=1 // pred_fallthru
      _
    // Predicated region
    $region78: #{avmodel_forward.1} parent=1 // pred_check
      _
    $region79: #{avmodel_forward.1} parent=1 // pred_check_branch
      %167 = sbr.rel (0) target = $region81
    $region80: #{avmodel_forward.1} parent=1 // pred_region
      %168 = dma.done [#allocation10], 4096
    $region81: #{avmodel_forward.1} parent=1 // pred_fallthru
      _
    // Predicated region
    $region82: #{avmodel_forward.1} parent=1 // pred_check
      _
    $region83: #{avmodel_forward.1} parent=1 // pred_check_branch
      %170 = sbr.rel (0) target = $region85
    $region84: #{avmodel_forward.1} parent=1 // pred_region
      %171 = dma.done [#allocation10], 2048
    $region85: #{avmodel_forward.1} parent=1 // pred_fallthru
      _
    // Predicated region
    $region86: #{avmodel_forward.1} parent=1 // pred_check
      _
    $region87: #{avmodel_forward.1} parent=1 // pred_check_branch
      %173 = sbr.rel (0) target = $region89
    $region88: #{avmodel_forward.1} parent=1 // pred_region
      %174 = dma.done [#allocation13], 2048
    $region89: #{avmodel_forward.1} parent=1 // pred_fallthru
      _
    // Predicated region
    $region90: #{avmodel_forward.1} parent=1 // pred_check
      _
    $region91: #{avmodel_forward.1} parent=1 // pred_check_branch
      %176 = sbr.rel (0) target = $region93
    $region92: #{avmodel_forward.1} parent=1 // pred_region
      %177 = dma.done [#allocation13], 4096
    $region93: #{avmodel_forward.1} parent=1 // pred_fallthru
      _
    // Predicated region
    $region94: #{avmodel_forward.1} parent=1 // pred_check
      _
    $region95: #{avmodel_forward.1} parent=1 // pred_check_branch
      %179 = sbr.rel (0) target = $region97
    $region96: #{avmodel_forward.1} parent=1 // pred_region
      %180 = dma.done [#allocation16], 4096
    $region97: #{avmodel_forward.1} parent=1 // pred_fallthru
      _
    // Predicated region
    $region98: #{avmodel_forward.1} parent=1 // pred_check
      _
    $region99: #{avmodel_forward.1} parent=1 // pred_check_branch
      %182 = sbr.rel (0) target = $region101
    $region100: #{avmodel_forward.1} parent=1 // pred_region
      %183 = dma.done [#allocation16], 2048
    $region101: #{avmodel_forward.1} parent=1 // pred_fallthru
      _
    %184 = sfence
    %v186 = vld [vmem:[%s2] sm:$0xff]
    %v187 = vld [vmem:[%s2 + $0x8] sm:$0xff]
    %v188 = vld [vmem:[%s2 + $0x10] sm:$0xff]
    %v189 = vld [vmem:[%s2 + $0x18] sm:$0xff]
    %s190 = sld [smem:[#allocation2]]
    %v191 = vstv %s190
    %v192 = vmul.f32 %v191, %v186
    %s193 = sld [smem:[#allocation2 + $0x1]]
    %v194 = vstv %s193
    %v195 = vmul.f32 %v194, %v187
    %v196 = vadd.f32 %v192, %v195
    %s197 = sld [smem:[#allocation2 + $0x2]]
    %v198 = vstv %s197
    %v199 = vmul.f32 %v198, %v188
    %v200 = vadd.f32 %v196, %v199
    %s201 = sld [smem:[#allocation2 + $0x3]]
    %v202 = vstv %s201
    %v203 = vmul.f32 %v202, %v189
    %v204 = vadd.f32 %v200, %v203
    %s205 = sld [smem:[#allocation2 + $0x4]]
    %v206 = vstv %s205
    %v207 = vadd.f32 %v204, %v206
    %v208 = vld [vmem:[%s1] sm:$0xff]
    %v209 = vld [vmem:[%s1 + $0x8] sm:$0xff]
    %v210 = vld [vmem:[%s3] ss:$0 sm:$0xff]
    %v211 = vld [vmem:[%s3 + $0x1] ss:$0 sm:$0xff]
    %s212 = scalar_lea.vmem %s3, 2
    %v213 = vld [vmem:[%s212] ss:$8 sm:$0x3]
    %v214 = vld [vmem:[%s3 + $0x3] ss:$0 sm:$0xff]
    %v215 = vld [vmem:[%s3 + $0x4] ss:$0 sm:$0xff]
    %v216 = vld [vmem:[%s3 + $0x5] ss:$0 sm:$0xff]
    %s217 = scalar_lea.vmem %s3, 6
    %v218 = vld [vmem:[%s217] ss:$8 sm:$0x3]
    %219 = vadd.xlane.f32.xlu0 %v207
    %v220 = vpop.xlane.xlu0 %219
    %v221 = vrcp.pop 128.0
    %v222 = vmul.f32 %v220, %v221
    %v223 = vsub.f32 %v207, %v222
    %v224 = vmul.f32 %v223, %v223
    %225 = vadd.xlane.f32.xlu0 %v224
    %v226 = vpop.xlane.xlu0 %225
    %v227 = vmul.f32 %v226, %v221
    %v228 = vadd.f32 %v227, 1e-05
    %v229 = vrsqrt.pop %v228
    %v230 = vmul.f32 %v223, %v229
    %v231 = vmul.f32 %v230, %v210
    %v232 = vadd.f32 %v231, %v211
    %v233 = vpack.c.bf16 %v232, %v232
    %v234 = vld [vmem:[#allocation5] sm:$0xff]
    %v235 = vld [vmem:[#allocation5 + $0x8] sm:$0xff]
    %v236 = vld [vmem:[#allocation5 + $0x10] sm:$0xff]
    %v237 = vld [vmem:[#allocation5 + $0x18] sm:$0xff]
    %v238 = vld [vmem:[#allocation5 + $0x20] sm:$0xff]
    %v239 = vld [vmem:[#allocation5 + $0x28] sm:$0xff]
    %v240 = vld [vmem:[#allocation5 + $0x30] sm:$0xff]
    %v241 = vld [vmem:[#allocation5 + $0x38] sm:$0xff]
    %v242 = vld [vmem:[#allocation5 + $0x40] sm:$0xff]
    %v243 = vld [vmem:[#allocation5 + $0x48] sm:$0xff]
    %v244 = vld [vmem:[#allocation5 + $0x50] sm:$0xff]
    %v245 = vld [vmem:[#allocation5 + $0x58] sm:$0xff]
    %v246 = vld [vmem:[#allocation5 + $0x60] sm:$0xff]
    %v247 = vld [vmem:[#allocation5 + $0x68] sm:$0xff]
    %v248 = vld [vmem:[#allocation5 + $0x70] sm:$0xff]
    %v249 = vld [vmem:[#allocation5 + $0x78] sm:$0xff]
    %v251 = vlaneseq
    %v252 = vshrl.u32 %v251, 7
    %v253 = vsub.s32 0, %v252
    %v254 = vrot.slane %v213, %v253
    %v255 = vlaneseq
    %v256 = vshrl.u32 %v255, 7
    %v257 = vsub.s32 1, %v256
    %v258 = vrot.slane %v213, %v257
    %v277 = vunpack.c.l.b16 %v234
    %v278 = vunpack.c.h.b16 %v234
    %v279 = vunpack.c.l.b16 %v235
    %v280 = vunpack.c.h.b16 %v235
    %v281 = vunpack.c.l.b16 %v236
    %v282 = vunpack.c.h.b16 %v236
    %v283 = vunpack.c.l.b16 %v237
    %v284 = vunpack.c.h.b16 %v237
    %v285 = vunpack.c.l.b16 %v238
    %v286 = vunpack.c.h.b16 %v238
    %v287 = vunpack.c.l.b16 %v239
    %v288 = vunpack.c.h.b16 %v239
    %v289 = vunpack.c.l.b16 %v240
    %v290 = vunpack.c.h.b16 %v240
    %v291 = vunpack.c.l.b16 %v241
    %v292 = vunpack.c.h.b16 %v241
    %v293 = vunpack.c.l.b16 %v242
    %v294 = vunpack.c.h.b16 %v242
    %v295 = vunpack.c.l.b16 %v243
    %v296 = vunpack.c.h.b16 %v243
    %v297 = vunpack.c.l.b16 %v244
    %v298 = vunpack.c.h.b16 %v244
    %v299 = vunpack.c.l.b16 %v245
    %v300 = vunpack.c.h.b16 %v245
    %v301 = vunpack.c.l.b16 %v246
    %v302 = vunpack.c.h.b16 %v246
    %v303 = vunpack.c.l.b16 %v247
    %v304 = vunpack.c.h.b16 %v247
    %v305 = vunpack.c.l.b16 %v248
    %v306 = vunpack.c.h.b16 %v248
    %v307 = vunpack.c.l.b16 %v249
    %v308 = vunpack.c.h.b16 %v249
    %v309 = vpack.c.b16 %v279, %v277
    %v310 = vpack.c.b16 %v280, %v278
    %v311 = vpack.c.b16 %v283, %v281
    %v312 = vpack.c.b16 %v284, %v282
    %v313 = vpack.c.b16 %v287, %v285
    %v314 = vpack.c.b16 %v288, %v286
    %v315 = vpack.c.b16 %v291, %v289
    %v316 = vpack.c.b16 %v292, %v290
    %v317 = vpack.c.b16 %v295, %v293
    %v318 = vpack.c.b16 %v296, %v294
    %v319 = vpack.c.b16 %v299, %v297
    %v320 = vpack.c.b16 %v300, %v298
    %v321 = vpack.c.b16 %v303, %v301
    %v322 = vpack.c.b16 %v304, %v302
    %v323 = vpack.c.b16 %v307, %v305
    %v324 = vpack.c.b16 %v308, %v306
    %341 = vmatprep.subr.bf16.mxu0 %v310
    %342 = vmatpush1.bf16.msra.mxu0 %v309
    %343 = vmatprep.subr.bf16.mxu0 %v312
    %344 = vmatpush1.bf16.msra.mxu0 %v311
    %345 = vmatprep.subr.bf16.mxu0 %v314
    %346 = vmatpush1.bf16.msra.mxu0 %v313
    %347 = vmatprep.subr.bf16.mxu0 %v316
    %348 = vmatpush1.bf16.msra.mxu0 %v315
    %349 = vmatprep.subr.bf16.mxu0 %v318
    %350 = vmatpush1.bf16.msra.mxu0 %v317
    %351 = vmatprep.subr.bf16.mxu0 %v320
    %352 = vmatpush1.bf16.msra.mxu0 %v319
    %353 = vmatprep.subr.bf16.mxu0 %v322
    %354 = vmatpush1.bf16.msra.mxu0 %v321
    %355 = vmatprep.subr.bf16.mxu0 %v324
    %356 = vmatpush1.bf16.msra.mxu0 %v323
    %357 = vmatprep.subr.bf16.mxu0 0
    %358 = vmatpush1.bf16.msra.mxu0 0
    %359 = vmatprep.subr.bf16.mxu0 0
    %360 = vmatpush1.bf16.msra.mxu0 0
    %361 = vmatprep.subr.bf16.mxu0 0
    %362 = vmatpush1.bf16.msra.mxu0 0
    %363 = vmatprep.subr.bf16.mxu0 0
    %364 = vmatpush1.bf16.msra.mxu0 0
    %365 = vmatprep.subr.bf16.mxu0 0
    %366 = vmatpush1.bf16.msra.mxu0 0
    %367 = vmatprep.subr.bf16.mxu0 0
    %368 = vmatpush1.bf16.msra.mxu0 0
    %369 = vmatprep.subr.bf16.mxu0 0
    %370 = vmatpush1.bf16.msra.mxu0 0
    %371 = vmatprep.subr.bf16.mxu0 0
    %372 = vmatpush1.bf16.msra.mxu0 0
    %373 = vmatprep.mubr.bf16.mxu0 0
    %374 = vmatmul.mubr.bf16.gmra.mrb[0].mxu0 %v233
    %v375 = vpop.f32.mrb[0].mxu0
    %v376 = vadd.f32 %v254, %v375
    %v377 = vpop.f32.mrb[0].mxu0
    %v378 = vadd.f32 %v258, %v377
    %v379 = vpop.f32.mrb[0].mxu0
    %v380 = vpop.f32.mrb[0].mxu0
    %381 = vdwg.mxu0
    %v382 = vpack.c.bf16 %v376, %v376
    %v383 = vpack.c.bf16 %v378, %v378
    %v384 = vld [vmem:[#allocation6] sm:$0xf]
    %v385 = vld [vmem:[#allocation6 + $0x4] sm:$0xf]
    %v386 = vld [vmem:[#allocation6 + $0x8] sm:$0xf]
    %v387 = vld [vmem:[#allocation6 + $0xc] sm:$0xf]
    %v388 = vld [vmem:[#allocation6 + $0x10] sm:$0xf]
    %v389 = vld [vmem:[#allocation6 + $0x14] sm:$0xf]
    %v390 = vld [vmem:[#allocation6 + $0x18] sm:$0xf]
    %v391 = vld [vmem:[#allocation6 + $0x1c] sm:$0xf]
    %v392 = vld [vmem:[#allocation6 + $0x20] sm:$0xf]
    %v393 = vld [vmem:[#allocation6 + $0x24] sm:$0xf]
    %v394 = vld [vmem:[#allocation6 + $0x28] sm:$0xf]
    %v395 = vld [vmem:[#allocation6 + $0x2c] sm:$0xf]
    %v396 = vld [vmem:[#allocation6 + $0x30] sm:$0xf]
    %v397 = vld [vmem:[#allocation6 + $0x34] sm:$0xf]
    %v398 = vld [vmem:[#allocation6 + $0x38] sm:$0xf]
    %v399 = vld [vmem:[#allocation6 + $0x3c] sm:$0xf]
    %v400 = vld [vmem:[#allocation6 + $0x40] sm:$0xf]
    %v401 = vld [vmem:[#allocation6 + $0x44] sm:$0xf]
    %v402 = vld [vmem:[#allocation6 + $0x48] sm:$0xf]
    %v403 = vld [vmem:[#allocation6 + $0x4c] sm:$0xf]
    %v404 = vld [vmem:[#allocation6 + $0x50] sm:$0xf]
    %v405 = vld [vmem:[#allocation6 + $0x54] sm:$0xf]
    %v406 = vld [vmem:[#allocation6 + $0x58] sm:$0xf]
    %v407 = vld [vmem:[#allocation6 + $0x5c] sm:$0xf]
    %v408 = vld [vmem:[#allocation6 + $0x60] sm:$0xf]
    %v409 = vld [vmem:[#allocation6 + $0x64] sm:$0xf]
    %v410 = vld [vmem:[#allocation6 + $0x68] sm:$0xf]
    %v411 = vld [vmem:[#allocation6 + $0x6c] sm:$0xf]
    %v412 = vld [vmem:[#allocation6 + $0x70] sm:$0xf]
    %v413 = vld [vmem:[#allocation6 + $0x74] sm:$0xf]
    %v414 = vld [vmem:[#allocation6 + $0x78] sm:$0xf]
    %v415 = vld [vmem:[#allocation6 + $0x7c] sm:$0xf]
    %v448 = vunpack.c.l.b16 %v384
    %v449 = vunpack.c.l.b16 %v385
    %v450 = vunpack.c.l.b16 %v386
    %v451 = vunpack.c.l.b16 %v387
    %v452 = vunpack.c.l.b16 %v388
    %v453 = vunpack.c.l.b16 %v389
    %v454 = vunpack.c.l.b16 %v390
    %v455 = vunpack.c.l.b16 %v391
    %v456 = vunpack.c.l.b16 %v392
    %v457 = vunpack.c.l.b16 %v393
    %v458 = vunpack.c.l.b16 %v394
    %v459 = vunpack.c.l.b16 %v395
    %v460 = vunpack.c.l.b16 %v396
    %v461 = vunpack.c.l.b16 %v397
    %v462 = vunpack.c.l.b16 %v398
    %v463 = vunpack.c.l.b16 %v399
    %v464 = vunpack.c.l.b16 %v400
    %v465 = vunpack.c.l.b16 %v401
    %v466 = vunpack.c.l.b16 %v402
    %v467 = vunpack.c.l.b16 %v403
    %v468 = vunpack.c.l.b16 %v404
    %v469 = vunpack.c.l.b16 %v405
    %v470 = vunpack.c.l.b16 %v406
    %v471 = vunpack.c.l.b16 %v407
    %v472 = vunpack.c.l.b16 %v408
    %v473 = vunpack.c.l.b16 %v409
    %v474 = vunpack.c.l.b16 %v410
    %v475 = vunpack.c.l.b16 %v411
    %v476 = vunpack.c.l.b16 %v412
    %v477 = vunpack.c.l.b16 %v413
    %v478 = vunpack.c.l.b16 %v414
    %v479 = vunpack.c.l.b16 %v415
    %v480 = vpack.c.b16 %v449, %v448
    %v481 = vpack.c.b16 %v451, %v450
    %v482 = vpack.c.b16 %v453, %v452
    %v483 = vpack.c.b16 %v455, %v454
    %v484 = vpack.c.b16 %v457, %v456
    %v485 = vpack.c.b16 %v459, %v458
    %v486 = vpack.c.b16 %v461, %v460
    %v487 = vpack.c.b16 %v463, %v462
    %v488 = vpack.c.b16 %v465, %v464
    %v489 = vpack.c.b16 %v467, %v466
    %v490 = vpack.c.b16 %v469, %v468
    %v491 = vpack.c.b16 %v471, %v470
    %v492 = vpack.c.b16 %v473, %v472
    %v493 = vpack.c.b16 %v475, %v474
    %v494 = vpack.c.b16 %v477, %v476
    %v495 = vpack.c.b16 %v479, %v478
    %512 = vmatprep.subr.bf16.mxu0 0
    %513 = vmatpush1.bf16.msra.mxu0 %v480
    %514 = vmatprep.subr.bf16.mxu0 0
    %515 = vmatpush1.bf16.msra.mxu0 %v481
    %516 = vmatprep.subr.bf16.mxu0 0
    %517 = vmatpush1.bf16.msra.mxu0 %v482
    %518 = vmatprep.subr.bf16.mxu0 0
    %519 = vmatpush1.bf16.msra.mxu0 %v483
    %520 = vmatprep.subr.bf16.mxu0 0
    %521 = vmatpush1.bf16.msra.mxu0 %v484
    %522 = vmatprep.subr.bf16.mxu0 0
    %523 = vmatpush1.bf16.msra.mxu0 %v485
    %524 = vmatprep.subr.bf16.mxu0 0
    %525 = vmatpush1.bf16.msra.mxu0 %v486
    %526 = vmatprep.subr.bf16.mxu0 0
    %527 = vmatpush1.bf16.msra.mxu0 %v487
    %528 = vmatprep.subr.bf16.mxu0 0
    %529 = vmatpush1.bf16.msra.mxu0 %v488
    %530 = vmatprep.subr.bf16.mxu0 0
    %531 = vmatpush1.bf16.msra.mxu0 %v489
    %532 = vmatprep.subr.bf16.mxu0 0
    %533 = vmatpush1.bf16.msra.mxu0 %v490
    %534 = vmatprep.subr.bf16.mxu0 0
    %535 = vmatpush1.bf16.msra.mxu0 %v491
    %536 = vmatprep.subr.bf16.mxu0 0
    %537 = vmatpush1.bf16.msra.mxu0 %v492
    %538 = vmatprep.subr.bf16.mxu0 0
    %539 = vmatpush1.bf16.msra.mxu0 %v493
    %540 = vmatprep.subr.bf16.mxu0 0
    %541 = vmatpush1.bf16.msra.mxu0 %v494
    %542 = vmatprep.subr.bf16.mxu0 0
    %543 = vmatpush1.bf16.msra.mxu0 %v495
    %544 = vmatprep.mubr.bf16.mxu0 %v383
    %545 = vmatmul.mubr.bf16.gmra.mrb[0].mxu0 %v382
    %v546 = vpop.f32.mrb[0].mxu0
    %v547 = vadd.f32 %v214, %v546
    %v548 = vpop.f32.mrb[0].mxu0
    %v549 = vpop.f32.mrb[0].mxu0
    %v550 = vpop.f32.mrb[0].mxu0
    %551 = vdwg.mxu0
    %v552 = vmul.f32 %v547, 0.5
    %v553 = vmul.f32 %v547, 0.70710677
    %v554 = verf.f32.pop %v553
    %v555 = vadd.f32 %v554, 1.0
    %v556 = vmul.f32 %v552, %v555
    %557 = vadd.xlane.f32.xlu0 %v556
    %v558 = vpop.xlane.xlu0 %557
    %v559 = vmul.f32 %v558, %v221
    %v560 = vsub.f32 %v556, %v559
    %v561 = vmul.f32 %v560, %v560
    %562 = vadd.xlane.f32.xlu0 %v561
    %v563 = vpop.xlane.xlu0 %562
    %v564 = vmul.f32 %v563, %v221
    %v565 = vadd.f32 %v564, 1e-05
    %v566 = vrsqrt.pop %v565
    %v567 = vmul.f32 %v560, %v566
    %v568 = vmul.f32 %v567, %v215
    %v569 = vadd.f32 %v568, %v216
    %v570 = vpack.c.bf16 %v569, %v569
    %v571 = vld [vmem:[#allocation8] sm:$0xff]
    %v572 = vld [vmem:[#allocation8 + $0x8] sm:$0xff]
    %v573 = vld [vmem:[#allocation8 + $0x10] sm:$0xff]
    %v574 = vld [vmem:[#allocation8 + $0x18] sm:$0xff]
    %v575 = vld [vmem:[#allocation8 + $0x20] sm:$0xff]
    %v576 = vld [vmem:[#allocation8 + $0x28] sm:$0xff]
    %v577 = vld [vmem:[#allocation8 + $0x30] sm:$0xff]
    %v578 = vld [vmem:[#allocation8 + $0x38] sm:$0xff]
    %v579 = vld [vmem:[#allocation8 + $0x40] sm:$0xff]
    %v580 = vld [vmem:[#allocation8 + $0x48] sm:$0xff]
    %v581 = vld [vmem:[#allocation8 + $0x50] sm:$0xff]
    %v582 = vld [vmem:[#allocation8 + $0x58] sm:$0xff]
    %v583 = vld [vmem:[#allocation8 + $0x60] sm:$0xff]
    %v584 = vld [vmem:[#allocation8 + $0x68] sm:$0xff]
    %v585 = vld [vmem:[#allocation8 + $0x70] sm:$0xff]
    %v586 = vld [vmem:[#allocation8 + $0x78] sm:$0xff]
    %v588 = vlaneseq
    %v589 = vshrl.u32 %v588, 7
    %v590 = vsub.s32 0, %v589
    %v591 = vrot.slane %v218, %v590
    %v592 = vlaneseq
    %v593 = vshrl.u32 %v592, 7
    %v594 = vsub.s32 1, %v593
    %v595 = vrot.slane %v218, %v594
    %v614 = vunpack.c.l.b16 %v571
    %v615 = vunpack.c.h.b16 %v571
    %v616 = vunpack.c.l.b16 %v572
    %v617 = vunpack.c.h.b16 %v572
    %v618 = vunpack.c.l.b16 %v573
    %v619 = vunpack.c.h.b16 %v573
    %v620 = vunpack.c.l.b16 %v574
    %v621 = vunpack.c.h.b16 %v574
    %v622 = vunpack.c.l.b16 %v575
    %v623 = vunpack.c.h.b16 %v575
    %v624 = vunpack.c.l.b16 %v576
    %v625 = vunpack.c.h.b16 %v576
    %v626 = vunpack.c.l.b16 %v577
    %v627 = vunpack.c.h.b16 %v577
    %v628 = vunpack.c.l.b16 %v578
    %v629 = vunpack.c.h.b16 %v578
    %v630 = vunpack.c.l.b16 %v579
    %v631 = vunpack.c.h.b16 %v579
    %v632 = vunpack.c.l.b16 %v580
    %v633 = vunpack.c.h.b16 %v580
    %v634 = vunpack.c.l.b16 %v581
    %v635 = vunpack.c.h.b16 %v581
    %v636 = vunpack.c.l.b16 %v582
    %v637 = vunpack.c.h.b16 %v582
    %v638 = vunpack.c.l.b16 %v583
    %v639 = vunpack.c.h.b16 %v583
    %v640 = vunpack.c.l.b16 %v584
    %v641 = vunpack.c.h.b16 %v584
    %v642 = vunpack.c.l.b16 %v585
    %v643 = vunpack.c.h.b16 %v585
    %v644 = vunpack.c.l.b16 %v586
    %v645 = vunpack.c.h.b16 %v586
    %v646 = vpack.c.b16 %v616, %v614
    %v647 = vpack.c.b16 %v617, %v615
    %v648 = vpack.c.b16 %v620, %v618
    %v649 = vpack.c.b16 %v621, %v619
    %v650 = vpack.c.b16 %v624, %v622
    %v651 = vpack.c.b16 %v625, %v623
    %v652 = vpack.c.b16 %v628, %v626
    %v653 = vpack.c.b16 %v629, %v627
    %v654 = vpack.c.b16 %v632, %v630
    %v655 = vpack.c.b16 %v633, %v631
    %v656 = vpack.c.b16 %v636, %v634
    %v657 = vpack.c.b16 %v637, %v635
    %v658 = vpack.c.b16 %v640, %v638
    %v659 = vpack.c.b16 %v641, %v639
    %v660 = vpack.c.b16 %v644, %v642
    %v661 = vpack.c.b16 %v645, %v643
    %678 = vmatprep.subr.bf16.mxu0 %v647
    %679 = vmatpush1.bf16.msra.mxu0 %v646
    %680 = vmatprep.subr.bf16.mxu0 %v649
    %681 = vmatpush1.bf16.msra.mxu0 %v648
    %682 = vmatprep.subr.bf16.mxu0 %v651
    %683 = vmatpush1.bf16.msra.mxu0 %v650
    %684 = vmatprep.subr.bf16.mxu0 %v653
    %685 = vmatpush1.bf16.msra.mxu0 %v652
    %686 = vmatprep.subr.bf16.mxu0 %v655
    %687 = vmatpush1.bf16.msra.mxu0 %v654
    %688 = vmatprep.subr.bf16.mxu0 %v657
    %689 = vmatpush1.bf16.msra.mxu0 %v656
    %690 = vmatprep.subr.bf16.mxu0 %v659
    %691 = vmatpush1.bf16.msra.mxu0 %v658
    %692 = vmatprep.subr.bf16.mxu0 %v661
    %693 = vmatpush1.bf16.msra.mxu0 %v660
    %694 = vmatprep.subr.bf16.mxu0 0
    %695 = vmatpush1.bf16.msra.mxu0 0
    %696 = vmatprep.subr.bf16.mxu0 0
    %697 = vmatpush1.bf16.msra.mxu0 0
    %698 = vmatprep.subr.bf16.mxu0 0
    %699 = vmatpush1.bf16.msra.mxu0 0
    %700 = vmatprep.subr.bf16.mxu0 0
    %701 = vmatpush1.bf16.msra.mxu0 0
    %702 = vmatprep.subr.bf16.mxu0 0
    %703 = vmatpush1.bf16.msra.mxu0 0
    %704 = vmatprep.subr.bf16.mxu0 0
    %705 = vmatpush1.bf16.msra.mxu0 0
    %706 = vmatprep.subr.bf16.mxu0 0
    %707 = vmatpush1.bf16.msra.mxu0 0
    %708 = vmatprep.subr.bf16.mxu0 0
    %709 = vmatpush1.bf16.msra.mxu0 0
    %710 = vmatprep.mubr.bf16.mxu0 0
    %711 = vmatmul.mubr.bf16.gmra.mrb[0].mxu0 %v570
    %v712 = vpop.f32.mrb[0].mxu0
    %v713 = vadd.f32 %v591, %v712
    %v714 = vpop.f32.mrb[0].mxu0
    %v715 = vadd.f32 %v595, %v714
    %v716 = vpop.f32.mrb[0].mxu0
    %v717 = vpop.f32.mrb[0].mxu0
    %718 = vdwg.mxu0
    %v719 = vmul.f32 %v713, 0.5
    %v720 = vmul.f32 %v715, 0.5
    %v721 = vmul.f32 %v713, 0.70710677
    %v722 = vmul.f32 %v715, 0.70710677
    %v723 = verf.f32.pop %v721
    %v724 = verf.f32.pop %v722
    %v725 = vadd.f32 %v723, 1.0
    %v726 = vadd.f32 %v724, 1.0
    %v727 = vmul.f32 %v719, %v725
    %v728 = vmul.f32 %v720, %v726
    %v729 = vadd.f32 %v376, %v727
    %v730 = vadd.f32 %v378, %v728
    %v731 = vld [vmem:[%s7] ss:$8 sm:$0x3]
    %s732 = scalar_lea.vmem %s7, 1
    %v733 = vld [vmem:[%s732] ss:$8 sm:$0x3]
    %s734 = scalar_lea.vmem %s7, 2
    %v735 = vld [vmem:[%s734] ss:$8 sm:$0x3]
    %v736 = vld [vmem:[%s7 + $0x3] ss:$0 sm:$0xff]
    %v737 = vld [vmem:[%s7 + $0x4] ss:$0 sm:$0xff]
    %v738 = vld [vmem:[%s7 + $0x5] ss:$0 sm:$0xff]
    %s739 = scalar_lea.vmem %s7, 6
    %v740 = vld [vmem:[%s739] ss:$8 sm:$0x3]
    %v741 = vadd.f32 %v208, %v209
    %742 = vadd.xlane.f32.xlu0 %v741
    %v743 = vpop.xlane.xlu0 %742
    %v744 = vrcp.pop 256.0
    %v745 = vmul.f32 %v743, %v744
    %v746 = vsub.f32 %v208, %v745
    %v747 = vsub.f32 %v209, %v745
    %v748 = vmul.f32 %v746, %v746
    %v749 = vmul.f32 %v747, %v747
    %v750 = vadd.f32 %v748, %v749
    %751 = vadd.xlane.f32.xlu0 %v750
    %v752 = vpop.xlane.xlu0 %751
    %v753 = vmul.f32 %v752, %v744
    %v754 = vadd.f32 %v753, 1e-05
    %v755 = vrsqrt.pop %v754
    %v756 = vmul.f32 %v746, %v755
    %v757 = vmul.f32 %v747, %v755
    %v759 = vlaneseq
    %v760 = vshrl.u32 %v759, 7
    %v761 = vsub.s32 0, %v760
    %v762 = vrot.slane %v731, %v761
    %v763 = vlaneseq
    %v764 = vshrl.u32 %v763, 7
    %v765 = vsub.s32 1, %v764
    %v766 = vrot.slane %v731, %v765
    %v769 = vmul.f32 %v756, %v762
    %v770 = vmul.f32 %v757, %v766
    %v772 = vlaneseq
    %v773 = vshrl.u32 %v772, 7
    %v774 = vsub.s32 0, %v773
    %v775 = vrot.slane %v733, %v774
    %v776 = vlaneseq
    %v777 = vshrl.u32 %v776, 7
    %v778 = vsub.s32 1, %v777
    %v779 = vrot.slane %v733, %v778
    %v782 = vadd.f32 %v769, %v775
    %v783 = vadd.f32 %v770, %v779
    %v784 = vpack.c.bf16 %v782, %v782
    %v785 = vpack.c.bf16 %v783, %v783
    %v786 = vld [vmem:[#allocation9] sm:$0xff]
    %v787 = vld [vmem:[#allocation9 + $0x8] sm:$0xff]
    %v788 = vld [vmem:[#allocation9 + $0x10] sm:$0xff]
    %v789 = vld [vmem:[#allocation9 + $0x18] sm:$0xff]
    %v790 = vld [vmem:[#allocation9 + $0x20] sm:$0xff]
    %v791 = vld [vmem:[#allocation9 + $0x28] sm:$0xff]
    %v792 = vld [vmem:[#allocation9 + $0x30] sm:$0xff]
    %v793 = vld [vmem:[#allocation9 + $0x38] sm:$0xff]
    %v794 = vld [vmem:[#allocation9 + $0x40] sm:$0xff]
    %v795 = vld [vmem:[#allocation9 + $0x48] sm:$0xff]
    %v796 = vld [vmem:[#allocation9 + $0x50] sm:$0xff]
    %v797 = vld [vmem:[#allocation9 + $0x58] sm:$0xff]
    %v798 = vld [vmem:[#allocation9 + $0x60] sm:$0xff]
    %v799 = vld [vmem:[#allocation9 + $0x68] sm:$0xff]
    %v800 = vld [vmem:[#allocation9 + $0x70] sm:$0xff]
    %v801 = vld [vmem:[#allocation9 + $0x78] sm:$0xff]
    %v802 = vld [vmem:[#allocation9 + $0x80] sm:$0xff]
    %v803 = vld [vmem:[#allocation9 + $0x88] sm:$0xff]
    %v804 = vld [vmem:[#allocation9 + $0x90] sm:$0xff]
    %v805 = vld [vmem:[#allocation9 + $0x98] sm:$0xff]
    %v806 = vld [vmem:[#allocation9 + $0xa0] sm:$0xff]
    %v807 = vld [vmem:[#allocation9 + $0xa8] sm:$0xff]
    %v808 = vld [vmem:[#allocation9 + $0xb0] sm:$0xff]
    %v809 = vld [vmem:[#allocation9 + $0xb8] sm:$0xff]
    %v810 = vld [vmem:[#allocation9 + $0xc0] sm:$0xff]
    %v811 = vld [vmem:[#allocation9 + $0xc8] sm:$0xff]
    %v812 = vld [vmem:[#allocation9 + $0xd0] sm:$0xff]
    %v813 = vld [vmem:[#allocation9 + $0xd8] sm:$0xff]
    %v814 = vld [vmem:[#allocation9 + $0xe0] sm:$0xff]
    %v815 = vld [vmem:[#allocation9 + $0xe8] sm:$0xff]
    %v816 = vld [vmem:[#allocation9 + $0xf0] sm:$0xff]
    %v817 = vld [vmem:[#allocation9 + $0xf8] sm:$0xff]
    %v819 = vlaneseq
    %v820 = vshrl.u32 %v819, 7
    %v821 = vsub.s32 0, %v820
    %v822 = vrot.slane %v735, %v821
    %v823 = vlaneseq
    %v824 = vshrl.u32 %v823, 7
    %v825 = vsub.s32 1, %v824
    %v826 = vrot.slane %v735, %v825
    %v861 = vunpack.c.l.b16 %v786
    %v862 = vunpack.c.h.b16 %v786
    %v863 = vunpack.c.l.b16 %v787
    %v864 = vunpack.c.h.b16 %v787
    %v865 = vunpack.c.l.b16 %v788
    %v866 = vunpack.c.h.b16 %v788
    %v867 = vunpack.c.l.b16 %v789
    %v868 = vunpack.c.h.b16 %v789
    %v869 = vunpack.c.l.b16 %v790
    %v870 = vunpack.c.h.b16 %v790
    %v871 = vunpack.c.l.b16 %v791
    %v872 = vunpack.c.h.b16 %v791
    %v873 = vunpack.c.l.b16 %v792
    %v874 = vunpack.c.h.b16 %v792
    %v875 = vunpack.c.l.b16 %v793
    %v876 = vunpack.c.h.b16 %v793
    %v877 = vunpack.c.l.b16 %v794
    %v878 = vunpack.c.h.b16 %v794
    %v879 = vunpack.c.l.b16 %v795
    %v880 = vunpack.c.h.b16 %v795
    %v881 = vunpack.c.l.b16 %v796
    %v882 = vunpack.c.h.b16 %v796
    %v883 = vunpack.c.l.b16 %v797
    %v884 = vunpack.c.h.b16 %v797
    %v885 = vunpack.c.l.b16 %v798
    %v886 = vunpack.c.h.b16 %v798
    %v887 = vunpack.c.l.b16 %v799
    %v888 = vunpack.c.h.b16 %v799
    %v889 = vunpack.c.l.b16 %v800
    %v890 = vunpack.c.h.b16 %v800
    %v891 = vunpack.c.l.b16 %v801
    %v892 = vunpack.c.h.b16 %v801
    %v893 = vunpack.c.l.b16 %v802
    %v894 = vunpack.c.h.b16 %v802
    %v895 = vunpack.c.l.b16 %v803
    %v896 = vunpack.c.h.b16 %v803
    %v897 = vunpack.c.l.b16 %v804
    %v898 = vunpack.c.h.b16 %v804
    %v899 = vunpack.c.l.b16 %v805
    %v900 = vunpack.c.h.b16 %v805
    %v901 = vunpack.c.l.b16 %v806
    %v902 = vunpack.c.h.b16 %v806
    %v903 = vunpack.c.l.b16 %v807
    %v904 = vunpack.c.h.b16 %v807
    %v905 = vunpack.c.l.b16 %v808
    %v906 = vunpack.c.h.b16 %v808
    %v907 = vunpack.c.l.b16 %v809
    %v908 = vunpack.c.h.b16 %v809
    %v909 = vunpack.c.l.b16 %v810
    %v910 = vunpack.c.h.b16 %v810
    %v911 = vunpack.c.l.b16 %v811
    %v912 = vunpack.c.h.b16 %v811
    %v913 = vunpack.c.l.b16 %v812
    %v914 = vunpack.c.h.b16 %v812
    %v915 = vunpack.c.l.b16 %v813
    %v916 = vunpack.c.h.b16 %v813
    %v917 = vunpack.c.l.b16 %v814
    %v918 = vunpack.c.h.b16 %v814
    %v919 = vunpack.c.l.b16 %v815
    %v920 = vunpack.c.h.b16 %v815
    %v921 = vunpack.c.l.b16 %v816
    %v922 = vunpack.c.h.b16 %v816
    %v923 = vunpack.c.l.b16 %v817
    %v924 = vunpack.c.h.b16 %v817
    %v925 = vpack.c.b16 %v863, %v861
    %v926 = vpack.c.b16 %v864, %v862
    %v927 = vpack.c.b16 %v867, %v865
    %v928 = vpack.c.b16 %v868, %v866
    %v929 = vpack.c.b16 %v871, %v869
    %v930 = vpack.c.b16 %v872, %v870
    %v931 = vpack.c.b16 %v875, %v873
    %v932 = vpack.c.b16 %v876, %v874
    %v933 = vpack.c.b16 %v879, %v877
    %v934 = vpack.c.b16 %v880, %v878
    %v935 = vpack.c.b16 %v883, %v881
    %v936 = vpack.c.b16 %v884, %v882
    %v937 = vpack.c.b16 %v887, %v885
    %v938 = vpack.c.b16 %v888, %v886
    %v939 = vpack.c.b16 %v891, %v889
    %v940 = vpack.c.b16 %v892, %v890
    %v941 = vpack.c.b16 %v895, %v893
    %v942 = vpack.c.b16 %v896, %v894
    %v943 = vpack.c.b16 %v899, %v897
    %v944 = vpack.c.b16 %v900, %v898
    %v945 = vpack.c.b16 %v903, %v901
    %v946 = vpack.c.b16 %v904, %v902
    %v947 = vpack.c.b16 %v907, %v905
    %v948 = vpack.c.b16 %v908, %v906
    %v949 = vpack.c.b16 %v911, %v909
    %v950 = vpack.c.b16 %v912, %v910
    %v951 = vpack.c.b16 %v915, %v913
    %v952 = vpack.c.b16 %v916, %v914
    %v953 = vpack.c.b16 %v919, %v917
    %v954 = vpack.c.b16 %v920, %v918
    %v955 = vpack.c.b16 %v923, %v921
    %v956 = vpack.c.b16 %v924, %v922
    %989 = vmatprep.subr.bf16.mxu0 %v926
    %990 = vmatpush1.bf16.msra.mxu0 %v925
    %991 = vmatprep.subr.bf16.mxu0 %v928
    %992 = vmatpush1.bf16.msra.mxu0 %v927
    %993 = vmatprep.subr.bf16.mxu0 %v930
    %994 = vmatpush1.bf16.msra.mxu0 %v929
    %995 = vmatprep.subr.bf16.mxu0 %v932
    %996 = vmatpush1.bf16.msra.mxu0 %v931
    %997 = vmatprep.subr.bf16.mxu0 %v934
    %998 = vmatpush1.bf16.msra.mxu0 %v933
    %999 = vmatprep.subr.bf16.mxu0 %v936
    %1000 = vmatpush1.bf16.msra.mxu0 %v935
    %1001 = vmatprep.subr.bf16.mxu0 %v938
    %1002 = vmatpush1.bf16.msra.mxu0 %v937
    %1003 = vmatprep.subr.bf16.mxu0 %v940
    %1004 = vmatpush1.bf16.msra.mxu0 %v939
    %1005 = vmatprep.subr.bf16.mxu0 %v942
    %1006 = vmatpush1.bf16.msra.mxu0 %v941
    %1007 = vmatprep.subr.bf16.mxu0 %v944
    %1008 = vmatpush1.bf16.msra.mxu0 %v943
    %1009 = vmatprep.subr.bf16.mxu0 %v946
    %1010 = vmatpush1.bf16.msra.mxu0 %v945
    %1011 = vmatprep.subr.bf16.mxu0 %v948
    %1012 = vmatpush1.bf16.msra.mxu0 %v947
    %1013 = vmatprep.subr.bf16.mxu0 %v950
    %1014 = vmatpush1.bf16.msra.mxu0 %v949
    %1015 = vmatprep.subr.bf16.mxu0 %v952
    %1016 = vmatpush1.bf16.msra.mxu0 %v951
    %1017 = vmatprep.subr.bf16.mxu0 %v954
    %1018 = vmatpush1.bf16.msra.mxu0 %v953
    %1019 = vmatprep.subr.bf16.mxu0 %v956
    %1020 = vmatpush1.bf16.msra.mxu0 %v955
    %1021 = vmatprep.mubr.bf16.mxu0 %v785
    %1022 = vmatmul.mubr.bf16.gmra.mrb[0].mxu0 %v784
    %v1023 = vpop.f32.mrb[0].mxu0
    %v1024 = vadd.f32 %v822, %v1023
    %v1025 = vpop.f32.mrb[0].mxu0
    %v1026 = vadd.f32 %v826, %v1025
    %v1027 = vpop.f32.mrb[0].mxu0
    %v1028 = vpop.f32.mrb[0].mxu0
    %1029 = vdwg.mxu0
    %v1030 = vpack.c.bf16 %v1024, %v1024
    %v1031 = vpack.c.bf16 %v1026, %v1026
    %v1032 = vld [vmem:[#allocation11] sm:$0xf]
    %v1033 = vld [vmem:[#allocation11 + $0x4] sm:$0xf]
    %v1034 = vld [vmem:[#allocation11 + $0x8] sm:$0xf]
    %v1035 = vld [vmem:[#allocation11 + $0xc] sm:$0xf]
    %v1036 = vld [vmem:[#allocation11 + $0x10] sm:$0xf]
    %v1037 = vld [vmem:[#allocation11 + $0x14] sm:$0xf]
    %v1038 = vld [vmem:[#allocation11 + $0x18] sm:$0xf]
    %v1039 = vld [vmem:[#allocation11 + $0x1c] sm:$0xf]
    %v1040 = vld [vmem:[#allocation11 + $0x20] sm:$0xf]
    %v1041 = vld [vmem:[#allocation11 + $0x24] sm:$0xf]
    %v1042 = vld [vmem:[#allocation11 + $0x28] sm:$0xf]
    %v1043 = vld [vmem:[#allocation11 + $0x2c] sm:$0xf]
    %v1044 = vld [vmem:[#allocation11 + $0x30] sm:$0xf]
    %v1045 = vld [vmem:[#allocation11 + $0x34] sm:$0xf]
    %v1046 = vld [vmem:[#allocation11 + $0x38] sm:$0xf]
    %v1047 = vld [vmem:[#allocation11 + $0x3c] sm:$0xf]
    %v1048 = vld [vmem:[#allocation11 + $0x40] sm:$0xf]
    %v1049 = vld [vmem:[#allocation11 + $0x44] sm:$0xf]
    %v1050 = vld [vmem:[#allocation11 + $0x48] sm:$0xf]
    %v1051 = vld [vmem:[#allocation11 + $0x4c] sm:$0xf]
    %v1052 = vld [vmem:[#allocation11 + $0x50] sm:$0xf]
    %v1053 = vld [vmem:[#allocation11 + $0x54] sm:$0xf]
    %v1054 = vld [vmem:[#allocation11 + $0x58] sm:$0xf]
    %v1055 = vld [vmem:[#allocation11 + $0x5c] sm:$0xf]
    %v1056 = vld [vmem:[#allocation11 + $0x60] sm:$0xf]
    %v1057 = vld [vmem:[#allocation11 + $0x64] sm:$0xf]
    %v1058 = vld [vmem:[#allocation11 + $0x68] sm:$0xf]
    %v1059 = vld [vmem:[#allocation11 + $0x6c] sm:$0xf]
    %v1060 = vld [vmem:[#allocation11 + $0x70] sm:$0xf]
    %v1061 = vld [vmem:[#allocation11 + $0x74] sm:$0xf]
    %v1062 = vld [vmem:[#allocation11 + $0x78] sm:$0xf]
    %v1063 = vld [vmem:[#allocation11 + $0x7c] sm:$0xf]
    %v1096 = vunpack.c.l.b16 %v1032
    %v1097 = vunpack.c.l.b16 %v1033
    %v1098 = vunpack.c.l.b16 %v1034
    %v1099 = vunpack.c.l.b16 %v1035
    %v1100 = vunpack.c.l.b16 %v1036
    %v1101 = vunpack.c.l.b16 %v1037
    %v1102 = vunpack.c.l.b16 %v1038
    %v1103 = vunpack.c.l.b16 %v1039
    %v1104 = vunpack.c.l.b16 %v1040
    %v1105 = vunpack.c.l.b16 %v1041
    %v1106 = vunpack.c.l.b16 %v1042
    %v1107 = vunpack.c.l.b16 %v1043
    %v1108 = vunpack.c.l.b16 %v1044
    %v1109 = vunpack.c.l.b16 %v1045
    %v1110 = vunpack.c.l.b16 %v1046
    %v1111 = vunpack.c.l.b16 %v1047
    %v1112 = vunpack.c.l.b16 %v1048
    %v1113 = vunpack.c.l.b16 %v1049
    %v1114 = vunpack.c.l.b16 %v1050
    %v1115 = vunpack.c.l.b16 %v1051
    %v1116 = vunpack.c.l.b16 %v1052
    %v1117 = vunpack.c.l.b16 %v1053
    %v1118 = vunpack.c.l.b16 %v1054
    %v1119 = vunpack.c.l.b16 %v1055
    %v1120 = vunpack.c.l.b16 %v1056
    %v1121 = vunpack.c.l.b16 %v1057
    %v1122 = vunpack.c.l.b16 %v1058
    %v1123 = vunpack.c.l.b16 %v1059
    %v1124 = vunpack.c.l.b16 %v1060
    %v1125 = vunpack.c.l.b16 %v1061
    %v1126 = vunpack.c.l.b16 %v1062
    %v1127 = vunpack.c.l.b16 %v1063
    %v1128 = vpack.c.b16 %v1097, %v1096
    %v1129 = vpack.c.b16 %v1099, %v1098
    %v1130 = vpack.c.b16 %v1101, %v1100
    %v1131 = vpack.c.b16 %v1103, %v1102
    %v1132 = vpack.c.b16 %v1105, %v1104
    %v1133 = vpack.c.b16 %v1107, %v1106
    %v1134 = vpack.c.b16 %v1109, %v1108
    %v1135 = vpack.c.b16 %v1111, %v1110
    %v1136 = vpack.c.b16 %v1113, %v1112
    %v1137 = vpack.c.b16 %v1115, %v1114
    %v1138 = vpack.c.b16 %v1117, %v1116
    %v1139 = vpack.c.b16 %v1119, %v1118
    %v1140 = vpack.c.b16 %v1121, %v1120
    %v1141 = vpack.c.b16 %v1123, %v1122
    %v1142 = vpack.c.b16 %v1125, %v1124
    %v1143 = vpack.c.b16 %v1127, %v1126
    %1160 = vmatprep.subr.bf16.mxu0 0
    %1161 = vmatpush1.bf16.msra.mxu0 %v1128
    %1162 = vmatprep.subr.bf16.mxu0 0
    %1163 = vmatpush1.bf16.msra.mxu0 %v1129
    %1164 = vmatprep.subr.bf16.mxu0 0
    %1165 = vmatpush1.bf16.msra.mxu0 %v1130
    %1166 = vmatprep.subr.bf16.mxu0 0
    %1167 = vmatpush1.bf16.msra.mxu0 %v1131
    %1168 = vmatprep.subr.bf16.mxu0 0
    %1169 = vmatpush1.bf16.msra.mxu0 %v1132
    %1170 = vmatprep.subr.bf16.mxu0 0
    %1171 = vmatpush1.bf16.msra.mxu0 %v1133
    %1172 = vmatprep.subr.bf16.mxu0 0
    %1173 = vmatpush1.bf16.msra.mxu0 %v1134
    %1174 = vmatprep.subr.bf16.mxu0 0
    %1175 = vmatpush1.bf16.msra.mxu0 %v1135
    %1176 = vmatprep.subr.bf16.mxu0 0
    %1177 = vmatpush1.bf16.msra.mxu0 %v1136
    %1178 = vmatprep.subr.bf16.mxu0 0
    %1179 = vmatpush1.bf16.msra.mxu0 %v1137
    %1180 = vmatprep.subr.bf16.mxu0 0
    %1181 = vmatpush1.bf16.msra.mxu0 %v1138
    %1182 = vmatprep.subr.bf16.mxu0 0
    %1183 = vmatpush1.bf16.msra.mxu0 %v1139
    %1184 = vmatprep.subr.bf16.mxu0 0
    %1185 = vmatpush1.bf16.msra.mxu0 %v1140
    %1186 = vmatprep.subr.bf16.mxu0 0
    %1187 = vmatpush1.bf16.msra.mxu0 %v1141
    %1188 = vmatprep.subr.bf16.mxu0 0
    %1189 = vmatpush1.bf16.msra.mxu0 %v1142
    %1190 = vmatprep.subr.bf16.mxu0 0
    %1191 = vmatpush1.bf16.msra.mxu0 %v1143
    %1192 = vmatprep.mubr.bf16.mxu0 %v1031
    %1193 = vmatmul.mubr.bf16.gmra.mrb[0].mxu0 %v1030
    %v1194 = vpop.f32.mrb[0].mxu0
    %v1195 = vadd.f32 %v736, %v1194
    %v1196 = vpop.f32.mrb[0].mxu0
    %v1197 = vpop.f32.mrb[0].mxu0
    %v1198 = vpop.f32.mrb[0].mxu0
    %1199 = vdwg.mxu0
    %v1200 = vmul.f32 %v1195, 0.5
    %v1201 = vmul.f32 %v1195, 0.70710677
    %v1202 = verf.f32.pop %v1201
    %v1203 = vadd.f32 %v1202, 1.0
    %v1204 = vmul.f32 %v1200, %v1203
    %1205 = vadd.xlane.f32.xlu0 %v1204
    %v1206 = vpop.xlane.xlu0 %1205
    %v1207 = vmul.f32 %v1206, %v221
    %v1208 = vsub.f32 %v1204, %v1207
    %v1209 = vmul.f32 %v1208, %v1208
    %1210 = vadd.xlane.f32.xlu0 %v1209
    %v1211 = vpop.xlane.xlu0 %1210
    %v1212 = vmul.f32 %v1211, %v221
    %v1213 = vadd.f32 %v1212, 1e-05
    %v1214 = vrsqrt.pop %v1213
    %v1215 = vmul.f32 %v1208, %v1214
    %v1216 = vmul.f32 %v1215, %v737
    %v1217 = vadd.f32 %v1216, %v738
    %v1218 = vpack.c.bf16 %v1217, %v1217
    %v1219 = vld [vmem:[#allocation12] sm:$0xff]
    %v1220 = vld [vmem:[#allocation12 + $0x8] sm:$0xff]
    %v1221 = vld [vmem:[#allocation12 + $0x10] sm:$0xff]
    %v1222 = vld [vmem:[#allocation12 + $0x18] sm:$0xff]
    %v1223 = vld [vmem:[#allocation12 + $0x20] sm:$0xff]
    %v1224 = vld [vmem:[#allocation12 + $0x28] sm:$0xff]
    %v1225 = vld [vmem:[#allocation12 + $0x30] sm:$0xff]
    %v1226 = vld [vmem:[#allocation12 + $0x38] sm:$0xff]
    %v1227 = vld [vmem:[#allocation12 + $0x40] sm:$0xff]
    %v1228 = vld [vmem:[#allocation12 + $0x48] sm:$0xff]
    %v1229 = vld [vmem:[#allocation12 + $0x50] sm:$0xff]
    %v1230 = vld [vmem:[#allocation12 + $0x58] sm:$0xff]
    %v1231 = vld [vmem:[#allocation12 + $0x60] sm:$0xff]
    %v1232 = vld [vmem:[#allocation12 + $0x68] sm:$0xff]
    %v1233 = vld [vmem:[#allocation12 + $0x70] sm:$0xff]
    %v1234 = vld [vmem:[#allocation12 + $0x78] sm:$0xff]
    %v1236 = vlaneseq
    %v1237 = vshrl.u32 %v1236, 7
    %v1238 = vsub.s32 0, %v1237
    %v1239 = vrot.slane %v740, %v1238
    %v1240 = vlaneseq
    %v1241 = vshrl.u32 %v1240, 7
    %v1242 = vsub.s32 1, %v1241
    %v1243 = vrot.slane %v740, %v1242
    %v1262 = vunpack.c.l.b16 %v1219
    %v1263 = vunpack.c.h.b16 %v1219
    %v1264 = vunpack.c.l.b16 %v1220
    %v1265 = vunpack.c.h.b16 %v1220
    %v1266 = vunpack.c.l.b16 %v1221
    %v1267 = vunpack.c.h.b16 %v1221
    %v1268 = vunpack.c.l.b16 %v1222
    %v1269 = vunpack.c.h.b16 %v1222
    %v1270 = vunpack.c.l.b16 %v1223
    %v1271 = vunpack.c.h.b16 %v1223
    %v1272 = vunpack.c.l.b16 %v1224
    %v1273 = vunpack.c.h.b16 %v1224
    %v1274 = vunpack.c.l.b16 %v1225
    %v1275 = vunpack.c.h.b16 %v1225
    %v1276 = vunpack.c.l.b16 %v1226
    %v1277 = vunpack.c.h.b16 %v1226
    %v1278 = vunpack.c.l.b16 %v1227
    %v1279 = vunpack.c.h.b16 %v1227
    %v1280 = vunpack.c.l.b16 %v1228
    %v1281 = vunpack.c.h.b16 %v1228
    %v1282 = vunpack.c.l.b16 %v1229
    %v1283 = vunpack.c.h.b16 %v1229
    %v1284 = vunpack.c.l.b16 %v1230
    %v1285 = vunpack.c.h.b16 %v1230
    %v1286 = vunpack.c.l.b16 %v1231
    %v1287 = vunpack.c.h.b16 %v1231
    %v1288 = vunpack.c.l.b16 %v1232
    %v1289 = vunpack.c.h.b16 %v1232
    %v1290 = vunpack.c.l.b16 %v1233
    %v1291 = vunpack.c.h.b16 %v1233
    %v1292 = vunpack.c.l.b16 %v1234
    %v1293 = vunpack.c.h.b16 %v1234
    %v1294 = vpack.c.b16 %v1264, %v1262
    %v1295 = vpack.c.b16 %v1265, %v1263
    %v1296 = vpack.c.b16 %v1268, %v1266
    %v1297 = vpack.c.b16 %v1269, %v1267
    %v1298 = vpack.c.b16 %v1272, %v1270
    %v1299 = vpack.c.b16 %v1273, %v1271
    %v1300 = vpack.c.b16 %v1276, %v1274
    %v1301 = vpack.c.b16 %v1277, %v1275
    %v1302 = vpack.c.b16 %v1280, %v1278
    %v1303 = vpack.c.b16 %v1281, %v1279
    %v1304 = vpack.c.b16 %v1284, %v1282
    %v1305 = vpack.c.b16 %v1285, %v1283
    %v1306 = vpack.c.b16 %v1288, %v1286
    %v1307 = vpack.c.b16 %v1289, %v1287
    %v1308 = vpack.c.b16 %v1292, %v1290
    %v1309 = vpack.c.b16 %v1293, %v1291
    %1326 = vmatprep.subr.bf16.mxu0 %v1295
    %1327 = vmatpush1.bf16.msra.mxu0 %v1294
    %1328 = vmatprep.subr.bf16.mxu0 %v1297
    %1329 = vmatpush1.bf16.msra.mxu0 %v1296
    %1330 = vmatprep.subr.bf16.mxu0 %v1299
    %1331 = vmatpush1.bf16.msra.mxu0 %v1298
    %1332 = vmatprep.subr.bf16.mxu0 %v1301
    %1333 = vmatpush1.bf16.msra.mxu0 %v1300
    %1334 = vmatprep.subr.bf16.mxu0 %v1303
    %1335 = vmatpush1.bf16.msra.mxu0 %v1302
    %1336 = vmatprep.subr.bf16.mxu0 %v1305
    %1337 = vmatpush1.bf16.msra.mxu0 %v1304
    %1338 = vmatprep.subr.bf16.mxu0 %v1307
    %1339 = vmatpush1.bf16.msra.mxu0 %v1306
    %1340 = vmatprep.subr.bf16.mxu0 %v1309
    %1341 = vmatpush1.bf16.msra.mxu0 %v1308
    %1342 = vmatprep.subr.bf16.mxu0 0
    %1343 = vmatpush1.bf16.msra.mxu0 0
    %1344 = vmatprep.subr.bf16.mxu0 0
    %1345 = vmatpush1.bf16.msra.mxu0 0
    %1346 = vmatprep.subr.bf16.mxu0 0
    %1347 = vmatpush1.bf16.msra.mxu0 0
    %1348 = vmatprep.subr.bf16.mxu0 0
    %1349 = vmatpush1.bf16.msra.mxu0 0
    %1350 = vmatprep.subr.bf16.mxu0 0
    %1351 = vmatpush1.bf16.msra.mxu0 0
    %1352 = vmatprep.subr.bf16.mxu0 0
    %1353 = vmatpush1.bf16.msra.mxu0 0
    %1354 = vmatprep.subr.bf16.mxu0 0
    %1355 = vmatpush1.bf16.msra.mxu0 0
    %1356 = vmatprep.subr.bf16.mxu0 0
    %1357 = vmatpush1.bf16.msra.mxu0 0
    %1358 = vmatprep.mubr.bf16.mxu0 0
    %1359 = vmatmul.mubr.bf16.gmra.mrb[0].mxu0 %v1218
    %v1360 = vpop.f32.mrb[0].mxu0
    %v1361 = vadd.f32 %v1239, %v1360
    %v1362 = vpop.f32.mrb[0].mxu0
    %v1363 = vadd.f32 %v1243, %v1362
    %v1364 = vpop.f32.mrb[0].mxu0
    %v1365 = vpop.f32.mrb[0].mxu0
    %1366 = vdwg.mxu0
    %v1367 = vmul.f32 %v1361, 0.5
    %v1368 = vmul.f32 %v1363, 0.5
    %v1369 = vmul.f32 %v1361, 0.70710677
    %v1370 = vmul.f32 %v1363, 0.70710677
    %v1371 = verf.f32.pop %v1369
    %v1372 = verf.f32.pop %v1370
    %v1373 = vadd.f32 %v1371, 1.0
    %v1374 = vadd.f32 %v1372, 1.0
    %v1375 = vmul.f32 %v1367, %v1373
    %v1376 = vmul.f32 %v1368, %v1374
    %v1377 = vadd.f32 %v1024, %v1375
    %v1378 = vadd.f32 %v1026, %v1376
    %v1379 = vadd.f32 %v729, %v1377
    %v1380 = vadd.f32 %v730, %v1378
    %v1381 = vmul.f32 %v1379, 0.5
    %v1382 = vmul.f32 %v1380, 0.5
    %v1383 = vsub.f32 %v729, %v1381
    %v1384 = vsub.f32 %v730, %v1382
    %v1385 = vsub.f32 %v1377, %v1381
    %v1386 = vsub.f32 %v1378, %v1382
    %v1387 = vmul.f32 %v1383, %v1383
    %v1388 = vmul.f32 %v1384, %v1384
    %v1389 = vmul.f32 %v1385, %v1385
    %v1390 = vmul.f32 %v1386, %v1386
    %v1391 = vadd.f32 %v1387, %v1389
    %v1392 = vadd.f32 %v1388, %v1390
    %v1393 = vrsqrt.pop %v1391
    %v1394 = vmul.f32 %v1391, %v1393
    %vm1395 = vcmp.eq.f32.partialorder %v1391, inf
    %v1396 = vsel %vm1395, %v1391, %v1394
    %vm1397 = vcmp.eq.f32.partialorder %v1391, 0.0
    %v1398 = vand.u32 %v1391, 2147483648
    %v1399 = vsel %vm1397, %v1398, %v1396
    %v1400 = vrsqrt.pop %v1392
    %v1401 = vmul.f32 %v1392, %v1400
    %vm1402 = vcmp.eq.f32.partialorder %v1392, inf
    %v1403 = vsel %vm1402, %v1392, %v1401
    %vm1404 = vcmp.eq.f32.partialorder %v1392, 0.0
    %v1405 = vand.u32 %v1392, 2147483648
    %v1406 = vsel %vm1404, %v1405, %v1403
    %v1407 = vpack.c.bf16 %v1381, %v1381
    %v1408 = vpack.c.bf16 %v1382, %v1382
    %v1409 = vld [vmem:[#allocation14] sm:$0xff]
    %v1410 = vld [vmem:[#allocation14 + $0x8] sm:$0xff]
    %v1411 = vld [vmem:[#allocation14 + $0x10] sm:$0xff]
    %v1412 = vld [vmem:[#allocation14 + $0x18] sm:$0xff]
    %v1413 = vld [vmem:[#allocation14 + $0x20] sm:$0xff]
    %v1414 = vld [vmem:[#allocation14 + $0x28] sm:$0xff]
    %v1415 = vld [vmem:[#allocation14 + $0x30] sm:$0xff]
    %v1416 = vld [vmem:[#allocation14 + $0x38] sm:$0xff]
    %v1417 = vld [vmem:[#allocation14 + $0x40] sm:$0xff]
    %v1418 = vld [vmem:[#allocation14 + $0x48] sm:$0xff]
    %v1419 = vld [vmem:[#allocation14 + $0x50] sm:$0xff]
    %v1420 = vld [vmem:[#allocation14 + $0x58] sm:$0xff]
    %v1421 = vld [vmem:[#allocation14 + $0x60] sm:$0xff]
    %v1422 = vld [vmem:[#allocation14 + $0x68] sm:$0xff]
    %v1423 = vld [vmem:[#allocation14 + $0x70] sm:$0xff]
    %v1424 = vld [vmem:[#allocation14 + $0x78] sm:$0xff]
    %v1425 = vld [vmem:[#allocation14 + $0x80] sm:$0xff]
    %v1426 = vld [vmem:[#allocation14 + $0x88] sm:$0xff]
    %v1427 = vld [vmem:[#allocation14 + $0x90] sm:$0xff]
    %v1428 = vld [vmem:[#allocation14 + $0x98] sm:$0xff]
    %v1429 = vld [vmem:[#allocation14 + $0xa0] sm:$0xff]
    %v1430 = vld [vmem:[#allocation14 + $0xa8] sm:$0xff]
    %v1431 = vld [vmem:[#allocation14 + $0xb0] sm:$0xff]
    %v1432 = vld [vmem:[#allocation14 + $0xb8] sm:$0xff]
    %v1433 = vld [vmem:[#allocation14 + $0xc0] sm:$0xff]
    %v1434 = vld [vmem:[#allocation14 + $0xc8] sm:$0xff]
    %v1435 = vld [vmem:[#allocation14 + $0xd0] sm:$0xff]
    %v1436 = vld [vmem:[#allocation14 + $0xd8] sm:$0xff]
    %v1437 = vld [vmem:[#allocation14 + $0xe0] sm:$0xff]
    %v1438 = vld [vmem:[#allocation14 + $0xe8] sm:$0xff]
    %v1439 = vld [vmem:[#allocation14 + $0xf0] sm:$0xff]
    %v1440 = vld [vmem:[#allocation14 + $0xf8] sm:$0xff]
    %v1441 = vpack.c.bf16 %v1399, %v1399
    %v1442 = vpack.c.bf16 %v1406, %v1406
    %v1443 = vld [vmem:[#allocation15] sm:$0xff]
    %v1444 = vld [vmem:[#allocation15 + $0x8] sm:$0xff]
    %v1445 = vld [vmem:[#allocation15 + $0x10] sm:$0xff]
    %v1446 = vld [vmem:[#allocation15 + $0x18] sm:$0xff]
    %v1447 = vld [vmem:[#allocation15 + $0x20] sm:$0xff]
    %v1448 = vld [vmem:[#allocation15 + $0x28] sm:$0xff]
    %v1449 = vld [vmem:[#allocation15 + $0x30] sm:$0xff]
    %v1450 = vld [vmem:[#allocation15 + $0x38] sm:$0xff]
    %v1451 = vld [vmem:[#allocation15 + $0x40] sm:$0xff]
    %v1452 = vld [vmem:[#allocation15 + $0x48] sm:$0xff]
    %v1453 = vld [vmem:[#allocation15 + $0x50] sm:$0xff]
    %v1454 = vld [vmem:[#allocation15 + $0x58] sm:$0xff]
    %v1455 = vld [vmem:[#allocation15 + $0x60] sm:$0xff]
    %v1456 = vld [vmem:[#allocation15 + $0x68] sm:$0xff]
    %v1457 = vld [vmem:[#allocation15 + $0x70] sm:$0xff]
    %v1458 = vld [vmem:[#allocation15 + $0x78] sm:$0xff]
    %v1459 = vld [vmem:[#allocation15 + $0x80] sm:$0xff]
    %v1460 = vld [vmem:[#allocation15 + $0x88] sm:$0xff]
    %v1461 = vld [vmem:[#allocation15 + $0x90] sm:$0xff]
    %v1462 = vld [vmem:[#allocation15 + $0x98] sm:$0xff]
    %v1463 = vld [vmem:[#allocation15 + $0xa0] sm:$0xff]
    %v1464 = vld [vmem:[#allocation15 + $0xa8] sm:$0xff]
    %v1465 = vld [vmem:[#allocation15 + $0xb0] sm:$0xff]
    %v1466 = vld [vmem:[#allocation15 + $0xb8] sm:$0xff]
    %v1467 = vld [vmem:[#allocation15 + $0xc0] sm:$0xff]
    %v1468 = vld [vmem:[#allocation15 + $0xc8] sm:$0xff]
    %v1469 = vld [vmem:[#allocation15 + $0xd0] sm:$0xff]
    %v1470 = vld [vmem:[#allocation15 + $0xd8] sm:$0xff]
    %v1471 = vld [vmem:[#allocation15 + $0xe0] sm:$0xff]
    %v1472 = vld [vmem:[#allocation15 + $0xe8] sm:$0xff]
    %v1473 = vld [vmem:[#allocation15 + $0xf0] sm:$0xff]
    %v1474 = vld [vmem:[#allocation15 + $0xf8] sm:$0xff]
    %v1507 = vunpack.c.l.b16 %v1443
    %v1508 = vunpack.c.h.b16 %v1443
    %v1509 = vunpack.c.l.b16 %v1444
    %v1510 = vunpack.c.h.b16 %v1444
    %v1511 = vunpack.c.l.b16 %v1445
    %v1512 = vunpack.c.h.b16 %v1445
    %v1513 = vunpack.c.l.b16 %v1446
    %v1514 = vunpack.c.h.b16 %v1446
    %v1515 = vunpack.c.l.b16 %v1447
    %v1516 = vunpack.c.h.b16 %v1447
    %v1517 = vunpack.c.l.b16 %v1448
    %v1518 = vunpack.c.h.b16 %v1448
    %v1519 = vunpack.c.l.b16 %v1449
    %v1520 = vunpack.c.h.b16 %v1449
    %v1521 = vunpack.c.l.b16 %v1450
    %v1522 = vunpack.c.h.b16 %v1450
    %v1523 = vunpack.c.l.b16 %v1451
    %v1524 = vunpack.c.h.b16 %v1451
    %v1525 = vunpack.c.l.b16 %v1452
    %v1526 = vunpack.c.h.b16 %v1452
    %v1527 = vunpack.c.l.b16 %v1453
    %v1528 = vunpack.c.h.b16 %v1453
    %v1529 = vunpack.c.l.b16 %v1454
    %v1530 = vunpack.c.h.b16 %v1454
    %v1531 = vunpack.c.l.b16 %v1455
    %v1532 = vunpack.c.h.b16 %v1455
    %v1533 = vunpack.c.l.b16 %v1456
    %v1534 = vunpack.c.h.b16 %v1456
    %v1535 = vunpack.c.l.b16 %v1457
    %v1536 = vunpack.c.h.b16 %v1457
    %v1537 = vunpack.c.l.b16 %v1458
    %v1538 = vunpack.c.h.b16 %v1458
    %v1539 = vunpack.c.l.b16 %v1459
    %v1540 = vunpack.c.h.b16 %v1459
    %v1541 = vunpack.c.l.b16 %v1460
    %v1542 = vunpack.c.h.b16 %v1460
    %v1543 = vunpack.c.l.b16 %v1461
    %v1544 = vunpack.c.h.b16 %v1461
    %v1545 = vunpack.c.l.b16 %v1462
    %v1546 = vunpack.c.h.b16 %v1462
    %v1547 = vunpack.c.l.b16 %v1463
    %v1548 = vunpack.c.h.b16 %v1463
    %v1549 = vunpack.c.l.b16 %v1464
    %v1550 = vunpack.c.h.b16 %v1464
    %v1551 = vunpack.c.l.b16 %v1465
    %v1552 = vunpack.c.h.b16 %v1465
    %v1553 = vunpack.c.l.b16 %v1466
    %v1554 = vunpack.c.h.b16 %v1466
    %v1555 = vunpack.c.l.b16 %v1467
    %v1556 = vunpack.c.h.b16 %v1467
    %v1557 = vunpack.c.l.b16 %v1468
    %v1558 = vunpack.c.h.b16 %v1468
    %v1559 = vunpack.c.l.b16 %v1469
    %v1560 = vunpack.c.h.b16 %v1469
    %v1561 = vunpack.c.l.b16 %v1470
    %v1562 = vunpack.c.h.b16 %v1470
    %v1563 = vunpack.c.l.b16 %v1471
    %v1564 = vunpack.c.h.b16 %v1471
    %v1565 = vunpack.c.l.b16 %v1472
    %v1566 = vunpack.c.h.b16 %v1472
    %v1567 = vunpack.c.l.b16 %v1473
    %v1568 = vunpack.c.h.b16 %v1473
    %v1569 = vunpack.c.l.b16 %v1474
    %v1570 = vunpack.c.h.b16 %v1474
    %v1571 = vpack.c.b16 %v1509, %v1507
    %v1572 = vpack.c.b16 %v1510, %v1508
    %v1573 = vpack.c.b16 %v1513, %v1511
    %v1574 = vpack.c.b16 %v1514, %v1512
    %v1575 = vpack.c.b16 %v1517, %v1515
    %v1576 = vpack.c.b16 %v1518, %v1516
    %v1577 = vpack.c.b16 %v1521, %v1519
    %v1578 = vpack.c.b16 %v1522, %v1520
    %v1579 = vpack.c.b16 %v1525, %v1523
    %v1580 = vpack.c.b16 %v1526, %v1524
    %v1581 = vpack.c.b16 %v1529, %v1527
    %v1582 = vpack.c.b16 %v1530, %v1528
    %v1583 = vpack.c.b16 %v1533, %v1531
    %v1584 = vpack.c.b16 %v1534, %v1532
    %v1585 = vpack.c.b16 %v1537, %v1535
    %v1586 = vpack.c.b16 %v1538, %v1536
    %v1587 = vpack.c.b16 %v1541, %v1539
    %v1588 = vpack.c.b16 %v1542, %v1540
    %v1589 = vpack.c.b16 %v1545, %v1543
    %v1590 = vpack.c.b16 %v1546, %v1544
    %v1591 = vpack.c.b16 %v1549, %v1547
    %v1592 = vpack.c.b16 %v1550, %v1548
    %v1593 = vpack.c.b16 %v1553, %v1551
    %v1594 = vpack.c.b16 %v1554, %v1552
    %v1595 = vpack.c.b16 %v1557, %v1555
    %v1596 = vpack.c.b16 %v1558, %v1556
    %v1597 = vpack.c.b16 %v1561, %v1559
    %v1598 = vpack.c.b16 %v1562, %v1560
    %v1599 = vpack.c.b16 %v1565, %v1563
    %v1600 = vpack.c.b16 %v1566, %v1564
    %v1601 = vpack.c.b16 %v1569, %v1567
    %v1602 = vpack.c.b16 %v1570, %v1568
    %1635 = vmatprep.subr.bf16.mxu0 %v1572
    %1636 = vmatpush1.bf16.msra.mxu0 %v1571
    %1637 = vmatprep.subr.bf16.mxu0 %v1574
    %1638 = vmatpush1.bf16.msra.mxu0 %v1573
    %1639 = vmatprep.subr.bf16.mxu0 %v1576
    %1640 = vmatpush1.bf16.msra.mxu0 %v1575
    %1641 = vmatprep.subr.bf16.mxu0 %v1578
    %1642 = vmatpush1.bf16.msra.mxu0 %v1577
    %1643 = vmatprep.subr.bf16.mxu0 %v1580
    %1644 = vmatpush1.bf16.msra.mxu0 %v1579
    %1645 = vmatprep.subr.bf16.mxu0 %v1582
    %1646 = vmatpush1.bf16.msra.mxu0 %v1581
    %1647 = vmatprep.subr.bf16.mxu0 %v1584
    %1648 = vmatpush1.bf16.msra.mxu0 %v1583
    %1649 = vmatprep.subr.bf16.mxu0 %v1586
    %1650 = vmatpush1.bf16.msra.mxu0 %v1585
    %1651 = vmatprep.subr.bf16.mxu0 %v1588
    %1652 = vmatpush1.bf16.msra.mxu0 %v1587
    %1653 = vmatprep.subr.bf16.mxu0 %v1590
    %1654 = vmatpush1.bf16.msra.mxu0 %v1589
    %1655 = vmatprep.subr.bf16.mxu0 %v1592
    %1656 = vmatpush1.bf16.msra.mxu0 %v1591
    %1657 = vmatprep.subr.bf16.mxu0 %v1594
    %1658 = vmatpush1.bf16.msra.mxu0 %v1593
    %1659 = vmatprep.subr.bf16.mxu0 %v1596
    %1660 = vmatpush1.bf16.msra.mxu0 %v1595
    %1661 = vmatprep.subr.bf16.mxu0 %v1598
    %1662 = vmatpush1.bf16.msra.mxu0 %v1597
    %1663 = vmatprep.subr.bf16.mxu0 %v1600
    %1664 = vmatpush1.bf16.msra.mxu0 %v1599
    %1665 = vmatprep.subr.bf16.mxu0 %v1602
    %1666 = vmatpush1.bf16.msra.mxu0 %v1601
    %1667 = vmatprep.mubr.bf16.mxu0 %v1442
    %1668 = vmatmul.mubr.bf16.gmra.mrb[0].mxu0 %v1441
    %v1669 = vpop.f32.mrb[0].mxu0
    %v1670 = vadd.f32 0.0, %v1669
    %v1671 = vpop.f32.mrb[0].mxu0
    %v1672 = vadd.f32 0.0, %v1671
    %v1673 = vpop.f32.mrb[0].mxu0
    %v1674 = vpop.f32.mrb[0].mxu0
    %1675 = vdwg.mxu0
    %v1708 = vunpack.c.l.b16 %v1409
    %v1709 = vunpack.c.h.b16 %v1409
    %v1710 = vunpack.c.l.b16 %v1410
    %v1711 = vunpack.c.h.b16 %v1410
    %v1712 = vunpack.c.l.b16 %v1411
    %v1713 = vunpack.c.h.b16 %v1411
    %v1714 = vunpack.c.l.b16 %v1412
    %v1715 = vunpack.c.h.b16 %v1412
    %v1716 = vunpack.c.l.b16 %v1413
    %v1717 = vunpack.c.h.b16 %v1413
    %v1718 = vunpack.c.l.b16 %v1414
    %v1719 = vunpack.c.h.b16 %v1414
    %v1720 = vunpack.c.l.b16 %v1415
    %v1721 = vunpack.c.h.b16 %v1415
    %v1722 = vunpack.c.l.b16 %v1416
    %v1723 = vunpack.c.h.b16 %v1416
    %v1724 = vunpack.c.l.b16 %v1417
    %v1725 = vunpack.c.h.b16 %v1417
    %v1726 = vunpack.c.l.b16 %v1418
    %v1727 = vunpack.c.h.b16 %v1418
    %v1728 = vunpack.c.l.b16 %v1419
    %v1729 = vunpack.c.h.b16 %v1419
    %v1730 = vunpack.c.l.b16 %v1420
    %v1731 = vunpack.c.h.b16 %v1420
    %v1732 = vunpack.c.l.b16 %v1421
    %v1733 = vunpack.c.h.b16 %v1421
    %v1734 = vunpack.c.l.b16 %v1422
    %v1735 = vunpack.c.h.b16 %v1422
    %v1736 = vunpack.c.l.b16 %v1423
    %v1737 = vunpack.c.h.b16 %v1423
    %v1738 = vunpack.c.l.b16 %v1424
    %v1739 = vunpack.c.h.b16 %v1424
    %v1740 = vunpack.c.l.b16 %v1425
    %v1741 = vunpack.c.h.b16 %v1425
    %v1742 = vunpack.c.l.b16 %v1426
    %v1743 = vunpack.c.h.b16 %v1426
    %v1744 = vunpack.c.l.b16 %v1427
    %v1745 = vunpack.c.h.b16 %v1427
    %v1746 = vunpack.c.l.b16 %v1428
    %v1747 = vunpack.c.h.b16 %v1428
    %v1748 = vunpack.c.l.b16 %v1429
    %v1749 = vunpack.c.h.b16 %v1429
    %v1750 = vunpack.c.l.b16 %v1430
    %v1751 = vunpack.c.h.b16 %v1430
    %v1752 = vunpack.c.l.b16 %v1431
    %v1753 = vunpack.c.h.b16 %v1431
    %v1754 = vunpack.c.l.b16 %v1432
    %v1755 = vunpack.c.h.b16 %v1432
    %v1756 = vunpack.c.l.b16 %v1433
    %v1757 = vunpack.c.h.b16 %v1433
    %v1758 = vunpack.c.l.b16 %v1434
    %v1759 = vunpack.c.h.b16 %v1434
    %v1760 = vunpack.c.l.b16 %v1435
    %v1761 = vunpack.c.h.b16 %v1435
    %v1762 = vunpack.c.l.b16 %v1436
    %v1763 = vunpack.c.h.b16 %v1436
    %v1764 = vunpack.c.l.b16 %v1437
    %v1765 = vunpack.c.h.b16 %v1437
    %v1766 = vunpack.c.l.b16 %v1438
    %v1767 = vunpack.c.h.b16 %v1438
    %v1768 = vunpack.c.l.b16 %v1439
    %v1769 = vunpack.c.h.b16 %v1439
    %v1770 = vunpack.c.l.b16 %v1440
    %v1771 = vunpack.c.h.b16 %v1440
    %v1772 = vpack.c.b16 %v1710, %v1708
    %v1773 = vpack.c.b16 %v1711, %v1709
    %v1774 = vpack.c.b16 %v1714, %v1712
    %v1775 = vpack.c.b16 %v1715, %v1713
    %v1776 = vpack.c.b16 %v1718, %v1716
    %v1777 = vpack.c.b16 %v1719, %v1717
    %v1778 = vpack.c.b16 %v1722, %v1720
    %v1779 = vpack.c.b16 %v1723, %v1721
    %v1780 = vpack.c.b16 %v1726, %v1724
    %v1781 = vpack.c.b16 %v1727, %v1725
    %v1782 = vpack.c.b16 %v1730, %v1728
    %v1783 = vpack.c.b16 %v1731, %v1729
    %v1784 = vpack.c.b16 %v1734, %v1732
    %v1785 = vpack.c.b16 %v1735, %v1733
    %v1786 = vpack.c.b16 %v1738, %v1736
    %v1787 = vpack.c.b16 %v1739, %v1737
    %v1788 = vpack.c.b16 %v1742, %v1740
    %v1789 = vpack.c.b16 %v1743, %v1741
    %v1790 = vpack.c.b16 %v1746, %v1744
    %v1791 = vpack.c.b16 %v1747, %v1745
    %v1792 = vpack.c.b16 %v1750, %v1748
    %v1793 = vpack.c.b16 %v1751, %v1749
    %v1794 = vpack.c.b16 %v1754, %v1752
    %v1795 = vpack.c.b16 %v1755, %v1753
    %v1796 = vpack.c.b16 %v1758, %v1756
    %v1797 = vpack.c.b16 %v1759, %v1757
    %v1798 = vpack.c.b16 %v1762, %v1760
    %v1799 = vpack.c.b16 %v1763, %v1761
    %v1800 = vpack.c.b16 %v1766, %v1764
    %v1801 = vpack.c.b16 %v1767, %v1765
    %v1802 = vpack.c.b16 %v1770, %v1768
    %v1803 = vpack.c.b16 %v1771, %v1769
    %1836 = vmatprep.subr.bf16.mxu0 %v1773
    %1837 = vmatpush1.bf16.msra.mxu0 %v1772
    %1838 = vmatprep.subr.bf16.mxu0 %v1775
    %1839 = vmatpush1.bf16.msra.mxu0 %v1774
    %1840 = vmatprep.subr.bf16.mxu0 %v1777
    %1841 = vmatpush1.bf16.msra.mxu0 %v1776
    %1842 = vmatprep.subr.bf16.mxu0 %v1779
    %1843 = vmatpush1.bf16.msra.mxu0 %v1778
    %1844 = vmatprep.subr.bf16.mxu0 %v1781
    %1845 = vmatpush1.bf16.msra.mxu0 %v1780
    %1846 = vmatprep.subr.bf16.mxu0 %v1783
    %1847 = vmatpush1.bf16.msra.mxu0 %v1782
    %1848 = vmatprep.subr.bf16.mxu0 %v1785
    %1849 = vmatpush1.bf16.msra.mxu0 %v1784
    %1850 = vmatprep.subr.bf16.mxu0 %v1787
    %1851 = vmatpush1.bf16.msra.mxu0 %v1786
    %1852 = vmatprep.subr.bf16.mxu0 %v1789
    %1853 = vmatpush1.bf16.msra.mxu0 %v1788
    %1854 = vmatprep.subr.bf16.mxu0 %v1791
    %1855 = vmatpush1.bf16.msra.mxu0 %v1790
    %1856 = vmatprep.subr.bf16.mxu0 %v1793
    %1857 = vmatpush1.bf16.msra.mxu0 %v1792
    %1858 = vmatprep.subr.bf16.mxu0 %v1795
    %1859 = vmatpush1.bf16.msra.mxu0 %v1794
    %1860 = vmatprep.subr.bf16.mxu0 %v1797
    %1861 = vmatpush1.bf16.msra.mxu0 %v1796
    %1862 = vmatprep.subr.bf16.mxu0 %v1799
    %1863 = vmatpush1.bf16.msra.mxu0 %v1798
    %1864 = vmatprep.subr.bf16.mxu0 %v1801
    %1865 = vmatpush1.bf16.msra.mxu0 %v1800
    %1866 = vmatprep.subr.bf16.mxu0 %v1803
    %1867 = vmatpush1.bf16.msra.mxu0 %v1802
    %1868 = vmatprep.mubr.bf16.mxu0 %v1408
    %1869 = vmatmul.mubr.bf16.gmra.mrb[0].mxu0 %v1407
    %v1870 = vpop.f32.mrb[0].mxu0
    %v1871 = vadd.f32 %v1670, %v1870
    %v1872 = vpop.f32.mrb[0].mxu0
    %v1873 = vadd.f32 %v1672, %v1872
    %v1874 = vpop.f32.mrb[0].mxu0
    %v1875 = vpop.f32.mrb[0].mxu0
    %1876 = vdwg.mxu0
    %v1877 = vld [vmem:[%s13] ss:$8 sm:$0x3]
    %v1879 = vlaneseq
    %v1880 = vshrl.u32 %v1879, 7
    %v1881 = vsub.s32 0, %v1880
    %v1882 = vrot.slane %v1877, %v1881
    %v1883 = vlaneseq
    %v1884 = vshrl.u32 %v1883, 7
    %v1885 = vsub.s32 1, %v1884
    %v1886 = vrot.slane %v1877, %v1885
    %v1889 = vadd.f32 %v1871, %v1882
    %v1890 = vadd.f32 %v1873, %v1886
    %v1891 = vmax.f32 %v1889, 0.0
    %v1892 = vmax.f32 %v1890, 0.0
    %v1893 = vpack.c.bf16 %v1891, %v1891
    %v1894 = vpack.c.bf16 %v1892, %v1892
    %v1895 = vld [vmem:[#allocation17] sm:$0xf]
    %v1896 = vld [vmem:[#allocation17 + $0x4] sm:$0xf]
    %v1897 = vld [vmem:[#allocation17 + $0x8] sm:$0xf]
    %v1898 = vld [vmem:[#allocation17 + $0xc] sm:$0xf]
    %v1899 = vld [vmem:[#allocation17 + $0x10] sm:$0xf]
    %v1900 = vld [vmem:[#allocation17 + $0x14] sm:$0xf]
    %v1901 = vld [vmem:[#allocation17 + $0x18] sm:$0xf]
    %v1902 = vld [vmem:[#allocation17 + $0x1c] sm:$0xf]
    %v1903 = vld [vmem:[#allocation17 + $0x20] sm:$0xf]
    %v1904 = vld [vmem:[#allocation17 + $0x24] sm:$0xf]
    %v1905 = vld [vmem:[#allocation17 + $0x28] sm:$0xf]
    %v1906 = vld [vmem:[#allocation17 + $0x2c] sm:$0xf]
    %v1907 = vld [vmem:[#allocation17 + $0x30] sm:$0xf]
    %v1908 = vld [vmem:[#allocation17 + $0x34] sm:$0xf]
    %v1909 = vld [vmem:[#allocation17 + $0x38] sm:$0xf]
    %v1910 = vld [vmem:[#allocation17 + $0x3c] sm:$0xf]
    %v1911 = vld [vmem:[#allocation17 + $0x40] sm:$0xf]
    %v1912 = vld [vmem:[#allocation17 + $0x44] sm:$0xf]
    %v1913 = vld [vmem:[#allocation17 + $0x48] sm:$0xf]
    %v1914 = vld [vmem:[#allocation17 + $0x4c] sm:$0xf]
    %v1915 = vld [vmem:[#allocation17 + $0x50] sm:$0xf]
    %v1916 = vld [vmem:[#allocation17 + $0x54] sm:$0xf]
    %v1917 = vld [vmem:[#allocation17 + $0x58] sm:$0xf]
    %v1918 = vld [vmem:[#allocation17 + $0x5c] sm:$0xf]
    %v1919 = vld [vmem:[#allocation17 + $0x60] sm:$0xf]
    %v1920 = vld [vmem:[#allocation17 + $0x64] sm:$0xf]
    %v1921 = vld [vmem:[#allocation17 + $0x68] sm:$0xf]
    %v1922 = vld [vmem:[#allocation17 + $0x6c] sm:$0xf]
    %v1923 = vld [vmem:[#allocation17 + $0x70] sm:$0xf]
    %v1924 = vld [vmem:[#allocation17 + $0x74] sm:$0xf]
    %v1925 = vld [vmem:[#allocation17 + $0x78] sm:$0xf]
    %v1926 = vld [vmem:[#allocation17 + $0x7c] sm:$0xf]
    %v1927 = vld [vmem:[%s13 + $0x1] ss:$0 sm:$0xff]
    %v1960 = vunpack.c.l.b16 %v1895
    %v1961 = vunpack.c.l.b16 %v1896
    %v1962 = vunpack.c.l.b16 %v1897
    %v1963 = vunpack.c.l.b16 %v1898
    %v1964 = vunpack.c.l.b16 %v1899
    %v1965 = vunpack.c.l.b16 %v1900
    %v1966 = vunpack.c.l.b16 %v1901
    %v1967 = vunpack.c.l.b16 %v1902
    %v1968 = vunpack.c.l.b16 %v1903
    %v1969 = vunpack.c.l.b16 %v1904
    %v1970 = vunpack.c.l.b16 %v1905
    %v1971 = vunpack.c.l.b16 %v1906
    %v1972 = vunpack.c.l.b16 %v1907
    %v1973 = vunpack.c.l.b16 %v1908
    %v1974 = vunpack.c.l.b16 %v1909
    %v1975 = vunpack.c.l.b16 %v1910
    %v1976 = vunpack.c.l.b16 %v1911
    %v1977 = vunpack.c.l.b16 %v1912
    %v1978 = vunpack.c.l.b16 %v1913
    %v1979 = vunpack.c.l.b16 %v1914
    %v1980 = vunpack.c.l.b16 %v1915
    %v1981 = vunpack.c.l.b16 %v1916
    %v1982 = vunpack.c.l.b16 %v1917
    %v1983 = vunpack.c.l.b16 %v1918
    %v1984 = vunpack.c.l.b16 %v1919
    %v1985 = vunpack.c.l.b16 %v1920
    %v1986 = vunpack.c.l.b16 %v1921
    %v1987 = vunpack.c.l.b16 %v1922
    %v1988 = vunpack.c.l.b16 %v1923
    %v1989 = vunpack.c.l.b16 %v1924
    %v1990 = vunpack.c.l.b16 %v1925
    %v1991 = vunpack.c.l.b16 %v1926
    %v1992 = vpack.c.b16 %v1961, %v1960
    %v1993 = vpack.c.b16 %v1963, %v1962
    %v1994 = vpack.c.b16 %v1965, %v1964
    %v1995 = vpack.c.b16 %v1967, %v1966
    %v1996 = vpack.c.b16 %v1969, %v1968
    %v1997 = vpack.c.b16 %v1971, %v1970
    %v1998 = vpack.c.b16 %v1973, %v1972
    %v1999 = vpack.c.b16 %v1975, %v1974
    %v2000 = vpack.c.b16 %v1977, %v1976
    %v2001 = vpack.c.b16 %v1979, %v1978
    %v2002 = vpack.c.b16 %v1981, %v1980
    %v2003 = vpack.c.b16 %v1983, %v1982
    %v2004 = vpack.c.b16 %v1985, %v1984
    %v2005 = vpack.c.b16 %v1987, %v1986
    %v2006 = vpack.c.b16 %v1989, %v1988
    %v2007 = vpack.c.b16 %v1991, %v1990
    %2024 = vmatprep.subr.bf16.mxu0 0
    %2025 = vmatpush1.bf16.msra.mxu0 %v1992
    %2026 = vmatprep.subr.bf16.mxu0 0
    %2027 = vmatpush1.bf16.msra.mxu0 %v1993
    %2028 = vmatprep.subr.bf16.mxu0 0
    %2029 = vmatpush1.bf16.msra.mxu0 %v1994
    %2030 = vmatprep.subr.bf16.mxu0 0
    %2031 = vmatpush1.bf16.msra.mxu0 %v1995
    %2032 = vmatprep.subr.bf16.mxu0 0
    %2033 = vmatpush1.bf16.msra.mxu0 %v1996
    %2034 = vmatprep.subr.bf16.mxu0 0
    %2035 = vmatpush1.bf16.msra.mxu0 %v1997
    %2036 = vmatprep.subr.bf16.mxu0 0
    %2037 = vmatpush1.bf16.msra.mxu0 %v1998
    %2038 = vmatprep.subr.bf16.mxu0 0
    %2039 = vmatpush1.bf16.msra.mxu0 %v1999
    %2040 = vmatprep.subr.bf16.mxu0 0
    %2041 = vmatpush1.bf16.msra.mxu0 %v2000
    %2042 = vmatprep.subr.bf16.mxu0 0
    %2043 = vmatpush1.bf16.msra.mxu0 %v2001
    %2044 = vmatprep.subr.bf16.mxu0 0
    %2045 = vmatpush1.bf16.msra.mxu0 %v2002
    %2046 = vmatprep.subr.bf16.mxu0 0
    %2047 = vmatpush1.bf16.msra.mxu0 %v2003
    %2048 = vmatprep.subr.bf16.mxu0 0
    %2049 = vmatpush1.bf16.msra.mxu0 %v2004
    %2050 = vmatprep.subr.bf16.mxu0 0
    %2051 = vmatpush1.bf16.msra.mxu0 %v2005
    %2052 = vmatprep.subr.bf16.mxu0 0
    %2053 = vmatpush1.bf16.msra.mxu0 %v2006
    %2054 = vmatprep.subr.bf16.mxu0 0
    %2055 = vmatpush1.bf16.msra.mxu0 %v2007
    %2056 = vmatprep.mubr.bf16.mxu0 %v1894
    %2057 = vmatmul.mubr.bf16.gmra.mrb[0].mxu0 %v1893
    %v2058 = vpop.f32.mrb[0].mxu0
    %v2059 = vadd.f32 %v1927, %v2058
    %v2060 = vpop.f32.mrb[0].mxu0
    %v2061 = vpop.f32.mrb[0].mxu0
    %v2062 = vpop.f32.mrb[0].mxu0
    %2063 = vdwg.mxu0
    %2064 = vst [vmem:[%s15] sm:$0xff] %v2059
    // Predicated region
    $region102: #{avmodel_forward.1} parent=1 // pred_check
      _
    $region103: #{avmodel_forward.1} parent=1 // pred_check_branch
      %2066 = sbr.rel (0) target = $region105
    $region104: #{avmodel_forward.1} parent=1 // pred_region
      _
    $region105: #{avmodel_forward.1} parent=1 // pred_fallthru
      _
    // Predicated region
    $region106: #{avmodel_forward.1} parent=1 // pred_check
      _
    $region107: #{avmodel_forward.1} parent=1 // pred_check_branch
      %2068 = sbr.rel (0) target = $region109
    $region108: #{avmodel_forward.1} parent=1 // pred_region
      _
    $region109: #{avmodel_forward.1} parent=1 // pred_fallthru
      _
    %2069 = vsyncpa [#allocation3], 1
    %2070 = vsyncpa [#allocation7], 1
    %2071 = vsyncpa [#allocation10], 1
    %2072 = vsyncpa [#allocation13], 1
    %2073 = vsyncpa [#allocation16], 1
    %2074 = vsyncpa [#allocation4], 1

</llo_original>
